<compile_context>
chip_gen: v7x
topology: tpu7x:2x2x1
jax: 0.10.0
libtpu: 0.0.40
codegen_flags: <defaults>
</compile_context>

<pallas_src>
import math

import jax
import jax.numpy as jnp
import numpy as np
from jax.experimental import pallas as pl
from jax.experimental.pallas import tpu as pltpu

D_MODEL = 32
NHEAD = 4
HEAD_DIM = D_MODEL // NHEAD
DFF = 512                    # dim_feedforward default of the module
EPS = 1e-5                   # LayerNorm eps (PyTorch default)


def encoder_layer_kernel(x_ref,
                         wqkv_ref, bqkv_ref,
                         wo_ref, bo_ref,
                         w1_ref, b1_ref, w2_ref, b2_ref,
                         g1_ref, be1_ref, g2_ref, be2_ref,
                         o_ref,
                         ctx_sc):
    Bt, S, D = x_ref.shape
    H = NHEAD
    hd = D // H
    M = Bt * S
    scale = jnp.float32(1.0 / math.sqrt(hd))

    # Flatten the batch tile: all dense layers run on (M, D).
    x = x_ref[...].reshape(M, D)

    # ---- fused QKV projection: one (M, D) @ (D, 3D) matmul ----
    qkv = jnp.dot(x, wqkv_ref[...], preferred_element_type=jnp.float32) + bqkv_ref[...]

    # Transpose K ONCE per grid step to (Bt, D, S) so the per-head score
    # contraction is 'bqd,bdk->bqk' (no per-head implicit XLU transpose).
    k_t = jnp.swapaxes(qkv[:, D:2 * D].reshape(Bt, S, D), 1, 2)      # (Bt, D, S)

    # ---- per-head attention (scores are inherently per-head) ----
    for h in range(H):                       # static 4-iteration loop
        lo = h * hd
        qh = qkv[:, lo:lo + hd].reshape(Bt, S, hd) * scale           # (Bt, S, hd)
        kh = k_t[:, lo:lo + hd, :]                                   # (Bt, hd, S)
        vh = qkv[:, 2 * D + lo:2 * D + lo + hd].reshape(Bt, S, hd)   # (Bt, S, hd)
        s = jnp.einsum('bqd,bdk->bqk', qh, kh,
                       preferred_element_type=jnp.float32)           # (Bt, S, S)
        s = s - jnp.max(s, axis=-1, keepdims=True)
        p = jnp.exp(s)
        p = p * pl.reciprocal(jnp.sum(p, axis=-1, keepdims=True), approx=False)
        ctx_h = jnp.einsum('bqk,bkd->bqd', p, vh,
                           preferred_element_type=jnp.float32)       # (Bt, S, hd)
        # Accumulate into the (M, D) scratch instead of list+concat: bounds
        # live ranges (no spills at large M) and removes the concat relayout.
        ctx_sc[:, lo:lo + hd] = ctx_h.reshape(M, hd)

    # ---- fused output projection: one (M, D) @ (D, D) matmul ----
    attn = jnp.dot(ctx_sc[...], wo_ref[...],
                   preferred_element_type=jnp.float32) + bo_ref[...]
    # TODO(synk): dropout (p=0.2) is identity here -> eval-mode semantics.

    # ---- residual + LayerNorm 1 (post-norm) ----
    y = x + attn
    mu = jnp.mean(y, axis=-1, keepdims=True)
    var = jnp.mean((y - mu) * (y - mu), axis=-1, keepdims=True)
    y = (y - mu) * jax.lax.rsqrt(var + EPS) * g1_ref[...] + be1_ref[...]

    # ---- feed-forward: linear2(relu(linear1(y))) on flattened M ----
    h1 = jnp.dot(y, w1_ref[...], preferred_element_type=jnp.float32) + b1_ref[...]
    h1 = jnp.maximum(h1, 0.0)
    h2 = jnp.dot(h1, w2_ref[...], preferred_element_type=jnp.float32) + b2_ref[...]

    # ---- residual + LayerNorm 2 ----
    z = y + h2
    mu2 = jnp.mean(z, axis=-1, keepdims=True)
    var2 = jnp.mean((z - mu2) * (z - mu2), axis=-1, keepdims=True)
    z = (z - mu2) * jax.lax.rsqrt(var2 + EPS) * g2_ref[...] + be2_ref[...]

    o_ref[...] = z.reshape(Bt, S, D)


def _const_spec(a):
    """Full-array block with a constant index map (kept VMEM-resident)."""
    nd = a.ndim
    return pl.BlockSpec(a.shape, lambda b, _nd=nd: (0,) * _nd)


@jax.jit
def transformer_forward(x, params):
    B, S, D = x.shape
    F = params["w1"].shape[0]

    # Pre-transpose / pre-concatenate weights outside the kernel (one-time
    # XLA ops) so the kernel only does jnp.dot(x, wT) with no in-kernel .T.
    wqkv_t = params["in_proj_w"].T                       # (D, 3D)
    bqkv = params["in_proj_b"].reshape(1, 3 * D)
    wo_t = params["out_w"].T                             # (D, D)
    bo = params["out_b"].reshape(1, D)
    w1_t = params["w1"].T                                # (D, F)
    b1 = params["b1"].reshape(1, F)
    w2_t = params["w2"].T                                # (F, D)
    b2 = params["b2"].reshape(1, D)
    g1 = params["g1"].reshape(1, D)
    be1 = params["be1"].reshape(1, D)
    g2 = params["g2"].reshape(1, D)
    be2 = params["be2"].reshape(1, D)

    weight_list = [wqkv_t, bqkv, wo_t, bo, w1_t, b1, w2_t, b2, g1, be1, g2, be2]

    # Batch tiling: target ~1024 flattened rows per grid step (fills the MXU M
    # dimension and amortizes per-step pipeline overhead).
    ROWS_PER_STEP = 1024
    Bt = max(1, min(B, ROWS_PER_STEP // max(S, 1)))
    # If everything would collapse into a single step but the batch is big
    # enough to split while keeping >=256 rows/step, use >=2 steps so the
    # "parallel" axis can shard across v7x's two TensorCores.
    if Bt == B and B >= 2 and B * S >= 512:
        Bt = (B + 1) // 2
    # Snap Bt to a divisor of B: no padded tail rows through exp/reciprocal.
    while B % Bt:
        Bt -= 1
    grid = (B // Bt,)

    in_specs = [pl.BlockSpec((Bt, S, D), lambda b: (b, 0, 0))]
    # Constant index maps: weight blocks are not re-DMA'd across grid steps.
    in_specs += [_const_spec(w) for w in weight_list]
    out_spec = pl.BlockSpec((Bt, S, D), lambda b: (b, 0, 0))

    return pl.pallas_call(
        encoder_layer_kernel,
        out_shape=jax.ShapeDtypeStruct((B, S, D), jnp.float32),
        grid_spec=pltpu.PrefetchScalarGridSpec(
            num_scalar_prefetch=0,
            grid=grid,
            in_specs=in_specs,
            out_specs=out_spec,
            scratch_shapes=[pltpu.VMEM((Bt * S, D), jnp.float32)],
        ),
        compiler_params=pltpu.CompilerParams(
            # "parallel" -> megacore sharding of the batch axis; on v7x an
            # explicit pltpu.CORE_PARALLEL / core_map split is a further option.
            dimension_semantics=(pltpu.PARALLEL,)),
    )(x, *weight_list)


def make_params(key):
    """Deterministic synthetic params in PyTorch TransformerEncoderLayer layout."""
    ks = jax.random.split(key, 10)
    D, F = D_MODEL, DFF

    def init(k, shape, fan_in):
        return jax.random.normal(k, shape, jnp.float32) / jnp.sqrt(jnp.float32(fan_in))

    return dict(
        in_proj_w=init(ks[0], (3 * D, D), D),                     # (3D, D)
        in_proj_b=0.02 * jax.random.normal(ks[1], (3 * D,), jnp.float32),
        out_w=init(ks[2], (D, D), D),                             # (D, D)
        out_b=0.02 * jax.random.normal(ks[3], (D,), jnp.float32),
        w1=init(ks[4], (F, D), D),                                # linear1: (F, D)
        b1=0.02 * jax.random.normal(ks[5], (F,), jnp.float32),
        w2=init(ks[6], (D, F), F),                                # linear2: (D, F)
        b2=0.02 * jax.random.normal(ks[7], (D,), jnp.float32),
        g1=jnp.ones((D,), jnp.float32)
            + 0.05 * jax.random.normal(ks[8], (D,), jnp.float32),
        be1=0.02 * jax.random.normal(ks[9], (D,), jnp.float32),
        g2=jnp.ones((D,), jnp.float32),
        be2=jnp.zeros((D,), jnp.float32),
    )


def _layer_norm(t, g, b):
    mu = t.mean(-1, keepdims=True)
    var = ((t - mu) ** 2).mean(-1, keepdims=True)      # population variance
    return (t - mu) / jnp.sqrt(var + EPS) * g + b


def reference_forward(x, p):
    """Pure-JAX reference mirroring the PyTorch encoder layer (eval mode)."""
    B, S, D = x.shape
    H, hd = NHEAD, D // NHEAD
    qkv = x @ p["in_proj_w"].T + p["in_proj_b"]
    q, k, v = jnp.split(qkv, 3, axis=-1)

    def heads(t):
        return t.reshape(B, S, H, hd).transpose(0, 2, 1, 3)

    qh, kh, vh = heads(q), heads(k), heads(v)
    s = jnp.einsum('bhqd,bhkd->bhqk', qh, kh) / math.sqrt(hd)
    pr = jax.nn.softmax(s, axis=-1)
    ctx = jnp.einsum('bhqk,bhkd->bhqd', pr, vh).transpose(0, 2, 1, 3).reshape(B, S, D)
    attn = ctx @ p["out_w"].T + p["out_b"]
    y = _layer_norm(x + attn, p["g1"], p["be1"])
    h1 = jnp.maximum(y @ p["w1"].T + p["b1"], 0.0)
    h2 = h1 @ p["w2"].T + p["b2"]
    return _layer_norm(y + h2, p["g2"], p["be2"])


if __name__ == "__main__":
    key = jax.random.PRNGKey(0)
    kx, kp = jax.random.split(key)
    B, S = 2, 8
    x = jax.random.normal(kx, (B, S, D_MODEL), jnp.float32)
    params = make_params(kp)

    out = transformer_forward(x, params)
    out = jax.block_until_ready(out)

    ref = reference_forward(x, params)
    assert out.shape == (B, S, D_MODEL)
    # Strict-f32 path with exact softmax reciprocal: only summation-order
    # differences vs. the reference remain.
    np.testing.assert_allclose(np.asarray(out), np.asarray(ref), rtol=1e-3, atol=1e-3)
    print("KERNEL_OK")
</pallas_src>

<mosaic_0001>
module attributes {stable_mosaic.version = 11 : i64} {
  func.func @encoder_layer_kernel(%arg0: i32, %arg1: memref<2x8x32xf32, #tpu.memory_space<vmem>>, %arg2: memref<32x96xf32, #tpu.memory_space<vmem>>, %arg3: memref<1x96xf32, #tpu.memory_space<vmem>>, %arg4: memref<32x32xf32, #tpu.memory_space<vmem>>, %arg5: memref<1x32xf32, #tpu.memory_space<vmem>>, %arg6: memref<32x512xf32, #tpu.memory_space<vmem>>, %arg7: memref<1x512xf32, #tpu.memory_space<vmem>>, %arg8: memref<512x32xf32, #tpu.memory_space<vmem>>, %arg9: memref<1x32xf32, #tpu.memory_space<vmem>>, %arg10: memref<1x32xf32, #tpu.memory_space<vmem>>, %arg11: memref<1x32xf32, #tpu.memory_space<vmem>>, %arg12: memref<1x32xf32, #tpu.memory_space<vmem>>, %arg13: memref<1x32xf32, #tpu.memory_space<vmem>>, %arg14: memref<2x8x32xf32, #tpu.memory_space<vmem>>, %arg15: memref<16x32xf32, #tpu.memory_space<vmem>>) attributes {dimension_semantics = [#tpu.dimension_semantics<parallel>], iteration_bounds = array<i64: 1>, scalar_prefetch = 0 : i64, scratch_operands = 1 : i64, tpu.core_type = #tpu.core_type<tc>, window_params = [{transform_indices = @transform_0, window_bounds = array<i64: 2, 8, 32>}, {pipeline_mode = #tpu.pipeline_mode<synchronous>, transform_indices = @transform_1, window_bounds = array<i64: 32, 96>}, {pipeline_mode = #tpu.pipeline_mode<synchronous>, transform_indices = @transform_2, window_bounds = array<i64: 1, 96>}, {pipeline_mode = #tpu.pipeline_mode<synchronous>, transform_indices = @transform_3, window_bounds = array<i64: 32, 32>}, {pipeline_mode = #tpu.pipeline_mode<synchronous>, transform_indices = @transform_4, window_bounds = array<i64: 1, 32>}, {pipeline_mode = #tpu.pipeline_mode<synchronous>, transform_indices = @transform_5, window_bounds = array<i64: 32, 512>}, {pipeline_mode = #tpu.pipeline_mode<synchronous>, transform_indices = @transform_6, window_bounds = array<i64: 1, 512>}, {pipeline_mode = #tpu.pipeline_mode<synchronous>, transform_indices = @transform_7, window_bounds = array<i64: 512, 32>}, {pipeline_mode = #tpu.pipeline_mode<synchronous>, transform_indices = @transform_8, window_bounds = array<i64: 1, 32>}, {pipeline_mode = #tpu.pipeline_mode<synchronous>, transform_indices = @transform_9, window_bounds = array<i64: 1, 32>}, {pipeline_mode = #tpu.pipeline_mode<synchronous>, transform_indices = @transform_10, window_bounds = array<i64: 1, 32>}, {pipeline_mode = #tpu.pipeline_mode<synchronous>, transform_indices = @transform_11, window_bounds = array<i64: 1, 32>}, {pipeline_mode = #tpu.pipeline_mode<synchronous>, transform_indices = @transform_12, window_bounds = array<i64: 1, 32>}, {transform_indices = @transform_13, window_bounds = array<i64: 2, 8, 32>}]} {
    %c0 = arith.constant 0 : index
    %c0_0 = arith.constant 0 : index
    %c0_1 = arith.constant 0 : index
    %0 = vector.load %arg1[%c0, %c0_0, %c0_1] : memref<2x8x32xf32, #tpu.memory_space<vmem>>, vector<2x8x32xf32>
    %1 = vector.shape_cast %0 : vector<2x8x32xf32> to vector<16x32xf32>
    %c0_2 = arith.constant 0 : index
    %c0_3 = arith.constant 0 : index
    %2 = vector.load %arg2[%c0_2, %c0_3] : memref<32x96xf32, #tpu.memory_space<vmem>>, vector<32x96xf32>
    %cst = arith.constant dense<0.000000e+00> : vector<16x96xf32>
    %3 = tpu.matmul %1, %2, %cst {dimension_numbers = #tpu.dot_dimension_numbers<[1], [0], [0], [1], [0, 0, 1, 1], [], []>} : vector<16x32xf32>, vector<32x96xf32>, vector<16x96xf32> -> vector<16x96xf32>
    %c0_4 = arith.constant 0 : index
    %c0_5 = arith.constant 0 : index
    %4 = vector.load %arg3[%c0_4, %c0_5] : memref<1x96xf32, #tpu.memory_space<vmem>>, vector<1x96xf32>
    %5 = vector.broadcast %4 : vector<1x96xf32> to vector<16x96xf32>
    %6 = arith.addf %3, %5 : vector<16x96xf32>
    %7 = vector.extract_strided_slice %6 {offsets = [0, 32], sizes = [16, 32], strides = [1, 1]} : vector<16x96xf32> to vector<16x32xf32>
    %8 = vector.shape_cast %7 : vector<16x32xf32> to vector<2x8x32xf32>
    %9 = tpu.transpose %8, [0, 2, 1] : vector<2x8x32xf32> -> vector<2x32x8xf32>
    %10 = vector.extract_strided_slice %6 {offsets = [0, 0], sizes = [16, 8], strides = [1, 1]} : vector<16x96xf32> to vector<16x8xf32>
    %11 = vector.shape_cast %10 : vector<16x8xf32> to vector<2x8x8xf32>
    %cst_6 = arith.constant 0.353553385 : f32
    %12 = vector.broadcast %cst_6 : f32 to vector<2x8x8xf32>
    %13 = arith.mulf %11, %12 : vector<2x8x8xf32>
    %14 = vector.extract_strided_slice %9 {offsets = [0, 0, 0], sizes = [2, 8, 8], strides = [1, 1, 1]} : vector<2x32x8xf32> to vector<2x8x8xf32>
    %15 = vector.extract_strided_slice %6 {offsets = [0, 64], sizes = [16, 8], strides = [1, 1]} : vector<16x96xf32> to vector<16x8xf32>
    %16 = vector.shape_cast %15 : vector<16x8xf32> to vector<2x8x8xf32>
    "tpu.trace_start"() <{level = 10 : i32, message = "bqd,bdk->bqk"}> : () -> ()
    %cst_7 = arith.constant dense<0.000000e+00> : vector<2x8x8xf32>
    %17 = tpu.matmul %13, %14, %cst_7 {dimension_numbers = #tpu.dot_dimension_numbers<[2], [1], [1], [2], [0, 0, 0, 1, 1, 2], [0], [0]>} : vector<2x8x8xf32>, vector<2x8x8xf32>, vector<2x8x8xf32> -> vector<2x8x8xf32>
    "tpu.trace_stop"() : () -> ()
    %cst_8 = arith.constant dense<0xFF800000> : vector<2x8xf32>
    %18 = vector.multi_reduction <maximumf>, %17, %cst_8 [2] : vector<2x8x8xf32> to vector<2x8xf32>
    %19 = vector.shape_cast %18 : vector<2x8xf32> to vector<2x8x1xf32>
    %20 = vector.broadcast %19 : vector<2x8x1xf32> to vector<2x8x8xf32>
    %21 = arith.subf %17, %20 : vector<2x8x8xf32>
    %22 = math.exp %21 : vector<2x8x8xf32>
    %cst_9 = arith.constant dense<0.000000e+00> : vector<2x8xf32>
    %23 = vector.multi_reduction <add>, %22, %cst_9 [2] : vector<2x8x8xf32> to vector<2x8xf32>
    %24 = vector.shape_cast %23 : vector<2x8xf32> to vector<2x8x1xf32>
    %25 = tpu.reciprocal %24 : vector<2x8x1xf32> -> vector<2x8x1xf32>
    %26 = vector.broadcast %25 : vector<2x8x1xf32> to vector<2x8x8xf32>
    %27 = arith.mulf %22, %26 : vector<2x8x8xf32>
    "tpu.trace_start"() <{level = 10 : i32, message = "bqk,bkd->bqd"}> : () -> ()
    %cst_10 = arith.constant dense<0.000000e+00> : vector<2x8x8xf32>
    %28 = tpu.matmul %27, %16, %cst_10 {dimension_numbers = #tpu.dot_dimension_numbers<[2], [1], [1], [2], [0, 0, 0, 1, 1, 2], [0], [0]>} : vector<2x8x8xf32>, vector<2x8x8xf32>, vector<2x8x8xf32> -> vector<2x8x8xf32>
    "tpu.trace_stop"() : () -> ()
    %29 = vector.shape_cast %28 : vector<2x8x8xf32> to vector<16x8xf32>
    %c0_11 = arith.constant 0 : index
    %c0_12 = arith.constant 0 : index
    %30 = vector.load %arg15[%c0_11, %c0_12] : memref<16x32xf32, #tpu.memory_space<vmem>>, vector<16x8xf32>
    tpu.vector_store %arg15[%c0_11, %c0_12], %29 {strides = array<i32>} : memref<16x32xf32, #tpu.memory_space<vmem>>, vector<16x8xf32>,
    %31 = vector.extract_strided_slice %6 {offsets = [0, 8], sizes = [16, 8], strides = [1, 1]} : vector<16x96xf32> to vector<16x8xf32>
    %32 = vector.shape_cast %31 : vector<16x8xf32> to vector<2x8x8xf32>
    %cst_13 = arith.constant 0.353553385 : f32
    %33 = vector.broadcast %cst_13 : f32 to vector<2x8x8xf32>
    %34 = arith.mulf %32, %33 : vector<2x8x8xf32>
    %35 = vector.extract_strided_slice %9 {offsets = [0, 8, 0], sizes = [2, 8, 8], strides = [1, 1, 1]} : vector<2x32x8xf32> to vector<2x8x8xf32>
    %36 = vector.extract_strided_slice %6 {offsets = [0, 72], sizes = [16, 8], strides = [1, 1]} : vector<16x96xf32> to vector<16x8xf32>
    %37 = vector.shape_cast %36 : vector<16x8xf32> to vector<2x8x8xf32>
    "tpu.trace_start"() <{level = 10 : i32, message = "bqd,bdk->bqk"}> : () -> ()
    %cst_14 = arith.constant dense<0.000000e+00> : vector<2x8x8xf32>
    %38 = tpu.matmul %34, %35, %cst_14 {dimension_numbers = #tpu.dot_dimension_numbers<[2], [1], [1], [2], [0, 0, 0, 1, 1, 2], [0], [0]>} : vector<2x8x8xf32>, vector<2x8x8xf32>, vector<2x8x8xf32> -> vector<2x8x8xf32>
    "tpu.trace_stop"() : () -> ()
    %cst_15 = arith.constant dense<0xFF800000> : vector<2x8xf32>
    %39 = vector.multi_reduction <maximumf>, %38, %cst_15 [2] : vector<2x8x8xf32> to vector<2x8xf32>
    %40 = vector.shape_cast %39 : vector<2x8xf32> to vector<2x8x1xf32>
    %41 = vector.broadcast %40 : vector<2x8x1xf32> to vector<2x8x8xf32>
    %42 = arith.subf %38, %41 : vector<2x8x8xf32>
    %43 = math.exp %42 : vector<2x8x8xf32>
    %cst_16 = arith.constant dense<0.000000e+00> : vector<2x8xf32>
    %44 = vector.multi_reduction <add>, %43, %cst_16 [2] : vector<2x8x8xf32> to vector<2x8xf32>
    %45 = vector.shape_cast %44 : vector<2x8xf32> to vector<2x8x1xf32>
    %46 = tpu.reciprocal %45 : vector<2x8x1xf32> -> vector<2x8x1xf32>
    %47 = vector.broadcast %46 : vector<2x8x1xf32> to vector<2x8x8xf32>
    %48 = arith.mulf %43, %47 : vector<2x8x8xf32>
    "tpu.trace_start"() <{level = 10 : i32, message = "bqk,bkd->bqd"}> : () -> ()
    %cst_17 = arith.constant dense<0.000000e+00> : vector<2x8x8xf32>
    %49 = tpu.matmul %48, %37, %cst_17 {dimension_numbers = #tpu.dot_dimension_numbers<[2], [1], [1], [2], [0, 0, 0, 1, 1, 2], [0], [0]>} : vector<2x8x8xf32>, vector<2x8x8xf32>, vector<2x8x8xf32> -> vector<2x8x8xf32>
    "tpu.trace_stop"() : () -> ()
    %50 = vector.shape_cast %49 : vector<2x8x8xf32> to vector<16x8xf32>
    %c0_18 = arith.constant 0 : index
    %c8 = arith.constant 8 : index
    %51 = vector.load %arg15[%c0_18, %c8] : memref<16x32xf32, #tpu.memory_space<vmem>>, vector<16x8xf32>
    tpu.vector_store %arg15[%c0_18, %c8], %50 {strides = array<i32>} : memref<16x32xf32, #tpu.memory_space<vmem>>, vector<16x8xf32>,
    %52 = vector.extract_strided_slice %6 {offsets = [0, 16], sizes = [16, 8], strides = [1, 1]} : vector<16x96xf32> to vector<16x8xf32>
    %53 = vector.shape_cast %52 : vector<16x8xf32> to vector<2x8x8xf32>
    %cst_19 = arith.constant 0.353553385 : f32
    %54 = vector.broadcast %cst_19 : f32 to vector<2x8x8xf32>
    %55 = arith.mulf %53, %54 : vector<2x8x8xf32>
    %56 = vector.extract_strided_slice %9 {offsets = [0, 16, 0], sizes = [2, 8, 8], strides = [1, 1, 1]} : vector<2x32x8xf32> to vector<2x8x8xf32>
    %57 = vector.extract_strided_slice %6 {offsets = [0, 80], sizes = [16, 8], strides = [1, 1]} : vector<16x96xf32> to vector<16x8xf32>
    %58 = vector.shape_cast %57 : vector<16x8xf32> to vector<2x8x8xf32>
    "tpu.trace_start"() <{level = 10 : i32, message = "bqd,bdk->bqk"}> : () -> ()
    %cst_20 = arith.constant dense<0.000000e+00> : vector<2x8x8xf32>
    %59 = tpu.matmul %55, %56, %cst_20 {dimension_numbers = #tpu.dot_dimension_numbers<[2], [1], [1], [2], [0, 0, 0, 1, 1, 2], [0], [0]>} : vector<2x8x8xf32>, vector<2x8x8xf32>, vector<2x8x8xf32> -> vector<2x8x8xf32>
    "tpu.trace_stop"() : () -> ()
    %cst_21 = arith.constant dense<0xFF800000> : vector<2x8xf32>
    %60 = vector.multi_reduction <maximumf>, %59, %cst_21 [2] : vector<2x8x8xf32> to vector<2x8xf32>
    %61 = vector.shape_cast %60 : vector<2x8xf32> to vector<2x8x1xf32>
    %62 = vector.broadcast %61 : vector<2x8x1xf32> to vector<2x8x8xf32>
    %63 = arith.subf %59, %62 : vector<2x8x8xf32>
    %64 = math.exp %63 : vector<2x8x8xf32>
    %cst_22 = arith.constant dense<0.000000e+00> : vector<2x8xf32>
    %65 = vector.multi_reduction <add>, %64, %cst_22 [2] : vector<2x8x8xf32> to vector<2x8xf32>
    %66 = vector.shape_cast %65 : vector<2x8xf32> to vector<2x8x1xf32>
    %67 = tpu.reciprocal %66 : vector<2x8x1xf32> -> vector<2x8x1xf32>
    %68 = vector.broadcast %67 : vector<2x8x1xf32> to vector<2x8x8xf32>
    %69 = arith.mulf %64, %68 : vector<2x8x8xf32>
    "tpu.trace_start"() <{level = 10 : i32, message = "bqk,bkd->bqd"}> : () -> ()
    %cst_23 = arith.constant dense<0.000000e+00> : vector<2x8x8xf32>
    %70 = tpu.matmul %69, %58, %cst_23 {dimension_numbers = #tpu.dot_dimension_numbers<[2], [1], [1], [2], [0, 0, 0, 1, 1, 2], [0], [0]>} : vector<2x8x8xf32>, vector<2x8x8xf32>, vector<2x8x8xf32> -> vector<2x8x8xf32>
    "tpu.trace_stop"() : () -> ()
    %71 = vector.shape_cast %70 : vector<2x8x8xf32> to vector<16x8xf32>
    %c0_24 = arith.constant 0 : index
    %c16 = arith.constant 16 : index
    %72 = vector.load %arg15[%c0_24, %c16] : memref<16x32xf32, #tpu.memory_space<vmem>>, vector<16x8xf32>
    tpu.vector_store %arg15[%c0_24, %c16], %71 {strides = array<i32>} : memref<16x32xf32, #tpu.memory_space<vmem>>, vector<16x8xf32>,
    %73 = vector.extract_strided_slice %6 {offsets = [0, 24], sizes = [16, 8], strides = [1, 1]} : vector<16x96xf32> to vector<16x8xf32>
    %74 = vector.shape_cast %73 : vector<16x8xf32> to vector<2x8x8xf32>
    %cst_25 = arith.constant 0.353553385 : f32
    %75 = vector.broadcast %cst_25 : f32 to vector<2x8x8xf32>
    %76 = arith.mulf %74, %75 : vector<2x8x8xf32>
    %77 = vector.extract_strided_slice %9 {offsets = [0, 24, 0], sizes = [2, 8, 8], strides = [1, 1, 1]} : vector<2x32x8xf32> to vector<2x8x8xf32>
    %78 = vector.extract_strided_slice %6 {offsets = [0, 88], sizes = [16, 8], strides = [1, 1]} : vector<16x96xf32> to vector<16x8xf32>
    %79 = vector.shape_cast %78 : vector<16x8xf32> to vector<2x8x8xf32>
    "tpu.trace_start"() <{level = 10 : i32, message = "bqd,bdk->bqk"}> : () -> ()
    %cst_26 = arith.constant dense<0.000000e+00> : vector<2x8x8xf32>
    %80 = tpu.matmul %76, %77, %cst_26 {dimension_numbers = #tpu.dot_dimension_numbers<[2], [1], [1], [2], [0, 0, 0, 1, 1, 2], [0], [0]>} : vector<2x8x8xf32>, vector<2x8x8xf32>, vector<2x8x8xf32> -> vector<2x8x8xf32>
    "tpu.trace_stop"() : () -> ()
    %cst_27 = arith.constant dense<0xFF800000> : vector<2x8xf32>
    %81 = vector.multi_reduction <maximumf>, %80, %cst_27 [2] : vector<2x8x8xf32> to vector<2x8xf32>
    %82 = vector.shape_cast %81 : vector<2x8xf32> to vector<2x8x1xf32>
    %83 = vector.broadcast %82 : vector<2x8x1xf32> to vector<2x8x8xf32>
    %84 = arith.subf %80, %83 : vector<2x8x8xf32>
    %85 = math.exp %84 : vector<2x8x8xf32>
    %cst_28 = arith.constant dense<0.000000e+00> : vector<2x8xf32>
    %86 = vector.multi_reduction <add>, %85, %cst_28 [2] : vector<2x8x8xf32> to vector<2x8xf32>
    %87 = vector.shape_cast %86 : vector<2x8xf32> to vector<2x8x1xf32>
    %88 = tpu.reciprocal %87 : vector<2x8x1xf32> -> vector<2x8x1xf32>
    %89 = vector.broadcast %88 : vector<2x8x1xf32> to vector<2x8x8xf32>
    %90 = arith.mulf %85, %89 : vector<2x8x8xf32>
    "tpu.trace_start"() <{level = 10 : i32, message = "bqk,bkd->bqd"}> : () -> ()
    %cst_29 = arith.constant dense<0.000000e+00> : vector<2x8x8xf32>
    %91 = tpu.matmul %90, %79, %cst_29 {dimension_numbers = #tpu.dot_dimension_numbers<[2], [1], [1], [2], [0, 0, 0, 1, 1, 2], [0], [0]>} : vector<2x8x8xf32>, vector<2x8x8xf32>, vector<2x8x8xf32> -> vector<2x8x8xf32>
    "tpu.trace_stop"() : () -> ()
    %92 = vector.shape_cast %91 : vector<2x8x8xf32> to vector<16x8xf32>
    %c0_30 = arith.constant 0 : index
    %c24 = arith.constant 24 : index
    %93 = vector.load %arg15[%c0_30, %c24] : memref<16x32xf32, #tpu.memory_space<vmem>>, vector<16x8xf32>
    tpu.vector_store %arg15[%c0_30, %c24], %92 {strides = array<i32>} : memref<16x32xf32, #tpu.memory_space<vmem>>, vector<16x8xf32>,
    %c0_31 = arith.constant 0 : index
    %c0_32 = arith.constant 0 : index
    %94 = vector.load %arg15[%c0_31, %c0_32] : memref<16x32xf32, #tpu.memory_space<vmem>>, vector<16x32xf32>
    %c0_33 = arith.constant 0 : index
    %c0_34 = arith.constant 0 : index
    %95 = vector.load %arg4[%c0_33, %c0_34] : memref<32x32xf32, #tpu.memory_space<vmem>>, vector<32x32xf32>
    %cst_35 = arith.constant dense<0.000000e+00> : vector<16x32xf32>
    %96 = tpu.matmul %94, %95, %cst_35 {dimension_numbers = #tpu.dot_dimension_numbers<[1], [0], [0], [1], [0, 0, 1, 1], [], []>} : vector<16x32xf32>, vector<32x32xf32>, vector<16x32xf32> -> vector<16x32xf32>
    %c0_36 = arith.constant 0 : index
    %c0_37 = arith.constant 0 : index
    %97 = vector.load %arg5[%c0_36, %c0_37] : memref<1x32xf32, #tpu.memory_space<vmem>>, vector<1x32xf32>
    %98 = vector.broadcast %97 : vector<1x32xf32> to vector<16x32xf32>
    %99 = arith.addf %96, %98 : vector<16x32xf32>
    %100 = arith.addf %1, %99 : vector<16x32xf32>
    %cst_38 = arith.constant dense<0.000000e+00> : vector<16xf32>
    %101 = vector.multi_reduction <add>, %100, %cst_38 [1] : vector<16x32xf32> to vector<16xf32>
    %102 = vector.shape_cast %101 : vector<16xf32> to vector<16x1xf32>
    %cst_39 = arith.constant 3.200000e+01 : f32
    %103 = vector.broadcast %cst_39 : f32 to vector<16x1xf32>
    %104 = arith.divf %102, %103 : vector<16x1xf32>
    %105 = vector.broadcast %104 : vector<16x1xf32> to vector<16x32xf32>
    %106 = arith.subf %100, %105 : vector<16x32xf32>
    %107 = vector.broadcast %104 : vector<16x1xf32> to vector<16x32xf32>
    %108 = arith.subf %100, %107 : vector<16x32xf32>
    %109 = arith.mulf %106, %108 : vector<16x32xf32>
    %cst_40 = arith.constant dense<0.000000e+00> : vector<16xf32>
    %110 = vector.multi_reduction <add>, %109, %cst_40 [1] : vector<16x32xf32> to vector<16xf32>
    %111 = vector.shape_cast %110 : vector<16xf32> to vector<16x1xf32>
    %cst_41 = arith.constant 3.200000e+01 : f32
    %112 = vector.broadcast %cst_41 : f32 to vector<16x1xf32>
    %113 = arith.divf %111, %112 : vector<16x1xf32>
    %114 = vector.broadcast %104 : vector<16x1xf32> to vector<16x32xf32>
    %115 = arith.subf %100, %114 : vector<16x32xf32>
    %cst_42 = arith.constant 9.99999974E-6 : f32
    %116 = vector.broadcast %cst_42 : f32 to vector<16x1xf32>
    %117 = arith.addf %113, %116 : vector<16x1xf32>
    %118 = math.rsqrt %117 : vector<16x1xf32>
    %119 = vector.broadcast %118 : vector<16x1xf32> to vector<16x32xf32>
    %120 = arith.mulf %115, %119 : vector<16x32xf32>
    %c0_43 = arith.constant 0 : index
    %c0_44 = arith.constant 0 : index
    %121 = vector.load %arg10[%c0_43, %c0_44] : memref<1x32xf32, #tpu.memory_space<vmem>>, vector<1x32xf32>
    %122 = vector.broadcast %121 : vector<1x32xf32> to vector<16x32xf32>
    %123 = arith.mulf %120, %122 : vector<16x32xf32>
    %c0_45 = arith.constant 0 : index
    %c0_46 = arith.constant 0 : index
    %124 = vector.load %arg11[%c0_45, %c0_46] : memref<1x32xf32, #tpu.memory_space<vmem>>, vector<1x32xf32>
    %125 = vector.broadcast %124 : vector<1x32xf32> to vector<16x32xf32>
    %126 = arith.addf %123, %125 : vector<16x32xf32>
    %c0_47 = arith.constant 0 : index
    %c0_48 = arith.constant 0 : index
    %127 = vector.load %arg6[%c0_47, %c0_48] : memref<32x512xf32, #tpu.memory_space<vmem>>, vector<32x512xf32>
    %cst_49 = arith.constant dense<0.000000e+00> : vector<16x512xf32>
    %128 = tpu.matmul %126, %127, %cst_49 {dimension_numbers = #tpu.dot_dimension_numbers<[1], [0], [0], [1], [0, 0, 1, 1], [], []>} : vector<16x32xf32>, vector<32x512xf32>, vector<16x512xf32> -> vector<16x512xf32>
    %c0_50 = arith.constant 0 : index
    %c0_51 = arith.constant 0 : index
    %129 = vector.load %arg7[%c0_50, %c0_51] : memref<1x512xf32, #tpu.memory_space<vmem>>, vector<1x512xf32>
    %130 = vector.broadcast %129 : vector<1x512xf32> to vector<16x512xf32>
    %131 = arith.addf %128, %130 : vector<16x512xf32>
    %cst_52 = arith.constant 0.000000e+00 : f32
    %132 = vector.broadcast %cst_52 : f32 to vector<16x512xf32>
    %133 = arith.maximumf %131, %132 : vector<16x512xf32>
    %c0_53 = arith.constant 0 : index
    %c0_54 = arith.constant 0 : index
    %134 = vector.load %arg8[%c0_53, %c0_54] : memref<512x32xf32, #tpu.memory_space<vmem>>, vector<512x32xf32>
    %cst_55 = arith.constant dense<0.000000e+00> : vector<16x32xf32>
    %135 = tpu.matmul %133, %134, %cst_55 {dimension_numbers = #tpu.dot_dimension_numbers<[1], [0], [0], [1], [0, 0, 1, 1], [], []>} : vector<16x512xf32>, vector<512x32xf32>, vector<16x32xf32> -> vector<16x32xf32>
    %c0_56 = arith.constant 0 : index
    %c0_57 = arith.constant 0 : index
    %136 = vector.load %arg9[%c0_56, %c0_57] : memref<1x32xf32, #tpu.memory_space<vmem>>, vector<1x32xf32>
    %137 = vector.broadcast %136 : vector<1x32xf32> to vector<16x32xf32>
    %138 = arith.addf %135, %137 : vector<16x32xf32>
    %139 = arith.addf %126, %138 : vector<16x32xf32>
    %cst_58 = arith.constant dense<0.000000e+00> : vector<16xf32>
    %140 = vector.multi_reduction <add>, %139, %cst_58 [1] : vector<16x32xf32> to vector<16xf32>
    %141 = vector.shape_cast %140 : vector<16xf32> to vector<16x1xf32>
    %cst_59 = arith.constant 3.200000e+01 : f32
    %142 = vector.broadcast %cst_59 : f32 to vector<16x1xf32>
    %143 = arith.divf %141, %142 : vector<16x1xf32>
    %144 = vector.broadcast %143 : vector<16x1xf32> to vector<16x32xf32>
    %145 = arith.subf %139, %144 : vector<16x32xf32>
    %146 = vector.broadcast %143 : vector<16x1xf32> to vector<16x32xf32>
    %147 = arith.subf %139, %146 : vector<16x32xf32>
    %148 = arith.mulf %145, %147 : vector<16x32xf32>
    %cst_60 = arith.constant dense<0.000000e+00> : vector<16xf32>
    %149 = vector.multi_reduction <add>, %148, %cst_60 [1] : vector<16x32xf32> to vector<16xf32>
    %150 = vector.shape_cast %149 : vector<16xf32> to vector<16x1xf32>
    %cst_61 = arith.constant 3.200000e+01 : f32
    %151 = vector.broadcast %cst_61 : f32 to vector<16x1xf32>
    %152 = arith.divf %150, %151 : vector<16x1xf32>
    %153 = vector.broadcast %143 : vector<16x1xf32> to vector<16x32xf32>
    %154 = arith.subf %139, %153 : vector<16x32xf32>
    %cst_62 = arith.constant 9.99999974E-6 : f32
    %155 = vector.broadcast %cst_62 : f32 to vector<16x1xf32>
    %156 = arith.addf %152, %155 : vector<16x1xf32>
    %157 = math.rsqrt %156 : vector<16x1xf32>
    %158 = vector.broadcast %157 : vector<16x1xf32> to vector<16x32xf32>
    %159 = arith.mulf %154, %158 : vector<16x32xf32>
    %c0_63 = arith.constant 0 : index
    %c0_64 = arith.constant 0 : index
    %160 = vector.load %arg12[%c0_63, %c0_64] : memref<1x32xf32, #tpu.memory_space<vmem>>, vector<1x32xf32>
    %161 = vector.broadcast %160 : vector<1x32xf32> to vector<16x32xf32>
    %162 = arith.mulf %159, %161 : vector<16x32xf32>
    %c0_65 = arith.constant 0 : index
    %c0_66 = arith.constant 0 : index
    %163 = vector.load %arg13[%c0_65, %c0_66] : memref<1x32xf32, #tpu.memory_space<vmem>>, vector<1x32xf32>
    %164 = vector.broadcast %163 : vector<1x32xf32> to vector<16x32xf32>
    %165 = arith.addf %162, %164 : vector<16x32xf32>
    %166 = vector.shape_cast %165 : vector<16x32xf32> to vector<2x8x32xf32>
    %c0_67 = arith.constant 0 : index
    %c0_68 = arith.constant 0 : index
    %c0_69 = arith.constant 0 : index
    %167 = vector.load %arg14[%c0_67, %c0_68, %c0_69] : memref<2x8x32xf32, #tpu.memory_space<vmem>>, vector<2x8x32xf32>
    tpu.vector_store %arg14[%c0_67, %c0_68, %c0_69], %166 {strides = array<i32>} : memref<2x8x32xf32, #tpu.memory_space<vmem>>, vector<2x8x32xf32>,
    return
  }
  func.func @transform_0(%arg0: i32) -> (i32, i32, i32) {
    %c0_i32 = arith.constant 0 : i32
    %c0_i32_0 = arith.constant 0 : i32
    %c0_i32_1 = arith.constant 0 : i32
    return %arg0, %c0_i32, %c0_i32_0 : i32, i32, i32
  }
  func.func @transform_1(%arg0: i32) -> (i32, i32) {
    %c0_i32 = arith.constant 0 : i32
    %c0_i32_0 = arith.constant 0 : i32
    %c0_i32_1 = arith.constant 0 : i32
    return %c0_i32, %c0_i32_0 : i32, i32
  }
  func.func @transform_2(%arg0: i32) -> (i32, i32) {
    %c0_i32 = arith.constant 0 : i32
    %c0_i32_0 = arith.constant 0 : i32
    %c0_i32_1 = arith.constant 0 : i32
    return %c0_i32, %c0_i32_0 : i32, i32
  }
  func.func @transform_3(%arg0: i32) -> (i32, i32) {
    %c0_i32 = arith.constant 0 : i32
    %c0_i32_0 = arith.constant 0 : i32
    %c0_i32_1 = arith.constant 0 : i32
    return %c0_i32, %c0_i32_0 : i32, i32
  }
  func.func @transform_4(%arg0: i32) -> (i32, i32) {
    %c0_i32 = arith.constant 0 : i32
    %c0_i32_0 = arith.constant 0 : i32
    %c0_i32_1 = arith.constant 0 : i32
    return %c0_i32, %c0_i32_0 : i32, i32
  }
  func.func @transform_5(%arg0: i32) -> (i32, i32) {
    %c0_i32 = arith.constant 0 : i32
    %c0_i32_0 = arith.constant 0 : i32
    %c0_i32_1 = arith.constant 0 : i32
    return %c0_i32, %c0_i32_0 : i32, i32
  }
  func.func @transform_6(%arg0: i32) -> (i32, i32) {
    %c0_i32 = arith.constant 0 : i32
    %c0_i32_0 = arith.constant 0 : i32
    %c0_i32_1 = arith.constant 0 : i32
    return %c0_i32, %c0_i32_0 : i32, i32
  }
  func.func @transform_7(%arg0: i32) -> (i32, i32) {
    %c0_i32 = arith.constant 0 : i32
    %c0_i32_0 = arith.constant 0 : i32
    %c0_i32_1 = arith.constant 0 : i32
    return %c0_i32, %c0_i32_0 : i32, i32
  }
  func.func @transform_8(%arg0: i32) -> (i32, i32) {
    %c0_i32 = arith.constant 0 : i32
    %c0_i32_0 = arith.constant 0 : i32
    %c0_i32_1 = arith.constant 0 : i32
    return %c0_i32, %c0_i32_0 : i32, i32
  }
  func.func @transform_9(%arg0: i32) -> (i32, i32) {
    %c0_i32 = arith.constant 0 : i32
    %c0_i32_0 = arith.constant 0 : i32
    %c0_i32_1 = arith.constant 0 : i32
    return %c0_i32, %c0_i32_0 : i32, i32
  }
  func.func @transform_10(%arg0: i32) -> (i32, i32) {
    %c0_i32 = arith.constant 0 : i32
    %c0_i32_0 = arith.constant 0 : i32
    %c0_i32_1 = arith.constant 0 : i32
    return %c0_i32, %c0_i32_0 : i32, i32
  }
  func.func @transform_11(%arg0: i32) -> (i32, i32) {
    %c0_i32 = arith.constant 0 : i32
    %c0_i32_0 = arith.constant 0 : i32
    %c0_i32_1 = arith.constant 0 : i32
    return %c0_i32, %c0_i32_0 : i32, i32
  }
  func.func @transform_12(%arg0: i32) -> (i32, i32) {
    %c0_i32 = arith.constant 0 : i32
    %c0_i32_0 = arith.constant 0 : i32
    %c0_i32_1 = arith.constant 0 : i32
    return %c0_i32, %c0_i32_0 : i32, i32
  }
  func.func @transform_13(%arg0: i32) -> (i32, i32, i32) {
    %c0_i32 = arith.constant 0 : i32
    %c0_i32_0 = arith.constant 0 : i32
    %c0_i32_1 = arith.constant 0 : i32
    return %arg0, %c0_i32, %c0_i32_0 : i32, i32, i32
  }
}

</mosaic_0001>

<llo_original>
// kernel: transformer_forward.1
$region0: #{transformer_forward.1}
  #allocation0 [shape = 'u32[]', space=smem, size = 0x4, offset = 0x4, fixed_abs, tag = 'smem constant byte address 0x4 - core index']
  #allocation1 [shape = 'u32[144,128]{1,0:T(1,128)}', space=vmem, size = 0x12000, scoped, tag = 'internal scratch']
  #allocation2 [shape = 'f32[16,32]{1,0:T(8,128)}', space=vmem, size = 0x2000, scoped, tag = 'scratch operand']
  %s0 = inlined_call_operand.vmem [shape: f32[2,8,32], index: 0, kind: input, shape index: {}]
  %s1 = inlined_call_operand.vmem [shape: f32[32,96], index: 1, kind: input, shape index: {}]
  %s2 = inlined_call_operand.vmem [shape: f32[1,96], index: 2, kind: input, shape index: {}]
  %s3 = inlined_call_operand.vmem [shape: f32[32,32], index: 3, kind: input, shape index: {}]
  %s4 = inlined_call_operand.vmem [shape: f32[1,32], index: 4, kind: input, shape index: {}]
  %s5 = inlined_call_operand.vmem [shape: f32[32,512], index: 5, kind: input, shape index: {}]
  %s6 = inlined_call_operand.vmem [shape: f32[1,512], index: 6, kind: input, shape index: {}]
  %s7 = inlined_call_operand.vmem [shape: f32[512,32], index: 7, kind: input, shape index: {}]
  %s8 = inlined_call_operand.vmem [shape: f32[1,32], index: 8, kind: input, shape index: {}]
  %s9 = inlined_call_operand.vmem [shape: f32[1,32], index: 9, kind: input, shape index: {}]
  %s10 = inlined_call_operand.vmem [shape: f32[1,32], index: 10, kind: input, shape index: {}]
  %s11 = inlined_call_operand.vmem [shape: f32[1,32], index: 11, kind: input, shape index: {}]
  %s12 = inlined_call_operand.vmem [shape: f32[1,32], index: 12, kind: input, shape index: {}]
  %s13 = inlined_call_operand.hbm [shape: f32[2,8,32], index: 13, kind: output, shape index: {}]
  %s14 = sld [smem:[#allocation0]]
  $region62: #{transformer_forward.1} parent=0
    _
  %s16 = ssub.s32 1, %s14
  %s17 = scalar_select 0, %s16, %s14
  $region1: #{transformer_forward.1} parent=0
    #allocation3 [shape = 'u8[8192]{0}', space=vmem, size = 0x2000, scoped, tag = 'output window, operand 0, single buffered']
    #allocation4 [shape = 's32[1]{0}', space=sflag, size = 0x4, scoped, tag = 'scoped memory for transformer_forward.1']
    %18 = vsyncpa [#allocation4], 0
    // Predicated region
    $region2: #{transformer_forward.1} parent=1 // pred_check
      _
    $region3: #{transformer_forward.1} parent=1 // pred_check_branch
      %20 = sbr.rel (0) target = $region5
    $region4: #{transformer_forward.1} parent=1 // pred_region
      _
    $region5: #{transformer_forward.1} parent=1 // pred_fallthru
      _
    // Predicated region
    $region6: #{transformer_forward.1} parent=1 // pred_check
      _
    $region7: #{transformer_forward.1} parent=1 // pred_check_branch
      %22 = sbr.rel (0) target = $region9
    $region8: #{transformer_forward.1} parent=1 // pred_region
      _
    $region9: #{transformer_forward.1} parent=1 // pred_fallthru
      _
    // Predicated region
    $region10: #{transformer_forward.1} parent=1 // pred_check
      _
    $region11: #{transformer_forward.1} parent=1 // pred_check_branch
      %24 = sbr.rel (0) target = $region13
    $region12: #{transformer_forward.1} parent=1 // pred_region
      _
    $region13: #{transformer_forward.1} parent=1 // pred_fallthru
      _
    // Predicated region
    $region14: #{transformer_forward.1} parent=1 // pred_check
      _
    $region15: #{transformer_forward.1} parent=1 // pred_check_branch
      %26 = sbr.rel (0) target = $region17
    $region16: #{transformer_forward.1} parent=1 // pred_region
      _
    $region17: #{transformer_forward.1} parent=1 // pred_fallthru
      _
    // Predicated region
    $region18: #{transformer_forward.1} parent=1 // pred_check
      _
    $region19: #{transformer_forward.1} parent=1 // pred_check_branch
      %28 = sbr.rel (0) target = $region21
    $region20: #{transformer_forward.1} parent=1 // pred_region
      _
    $region21: #{transformer_forward.1} parent=1 // pred_fallthru
      _
    // Predicated region
    $region22: #{transformer_forward.1} parent=1 // pred_check
      _
    $region23: #{transformer_forward.1} parent=1 // pred_check_branch
      %30 = sbr.rel (0) target = $region25
    $region24: #{transformer_forward.1} parent=1 // pred_region
      _
    $region25: #{transformer_forward.1} parent=1 // pred_fallthru
      _
    // Predicated region
    $region26: #{transformer_forward.1} parent=1 // pred_check
      _
    $region27: #{transformer_forward.1} parent=1 // pred_check_branch
      %32 = sbr.rel (0) target = $region29
    $region28: #{transformer_forward.1} parent=1 // pred_region
      _
    $region29: #{transformer_forward.1} parent=1 // pred_fallthru
      _
    // Predicated region
    $region30: #{transformer_forward.1} parent=1 // pred_check
      _
    $region31: #{transformer_forward.1} parent=1 // pred_check_branch
      %34 = sbr.rel (0) target = $region33
    $region32: #{transformer_forward.1} parent=1 // pred_region
      _
    $region33: #{transformer_forward.1} parent=1 // pred_fallthru
      _
    // Predicated region
    $region34: #{transformer_forward.1} parent=1 // pred_check
      _
    $region35: #{transformer_forward.1} parent=1 // pred_check_branch
      %36 = sbr.rel (0) target = $region37
    $region36: #{transformer_forward.1} parent=1 // pred_region
      _
    $region37: #{transformer_forward.1} parent=1 // pred_fallthru
      _
    // Predicated region
    $region38: #{transformer_forward.1} parent=1 // pred_check
      _
    $region39: #{transformer_forward.1} parent=1 // pred_check_branch
      %38 = sbr.rel (0) target = $region41
    $region40: #{transformer_forward.1} parent=1 // pred_region
      _
    $region41: #{transformer_forward.1} parent=1 // pred_fallthru
      _
    // Predicated region
    $region42: #{transformer_forward.1} parent=1 // pred_check
      _
    $region43: #{transformer_forward.1} parent=1 // pred_check_branch
      %40 = sbr.rel (0) target = $region45
    $region44: #{transformer_forward.1} parent=1 // pred_region
      _
    $region45: #{transformer_forward.1} parent=1 // pred_fallthru
      _
    // Predicated region
    $region46: #{transformer_forward.1} parent=1 // pred_check
      _
    $region47: #{transformer_forward.1} parent=1 // pred_check_branch
      %42 = sbr.rel (0) target = $region49
    $region48: #{transformer_forward.1} parent=1 // pred_region
      _
    $region49: #{transformer_forward.1} parent=1 // pred_fallthru
      _
    // Predicated region
    $region50: #{transformer_forward.1} parent=1 // pred_check
      _
    $region51: #{transformer_forward.1} parent=1 // pred_check_branch
      %44 = sbr.rel (0) target = $region53
    $region52: #{transformer_forward.1} parent=1 // pred_region
      _
    $region53: #{transformer_forward.1} parent=1 // pred_fallthru
      _
    %v45 = vld [vmem:[%s0] sm:$0xff]
    %v46 = vld [vmem:[%s0 + $0x8] sm:$0xff]
    %v47 = vld [vmem:[%s1] sm:$0xff]
    %v48 = vld [vmem:[%s1 + $0x8] sm:$0xff]
    %v49 = vld [vmem:[%s1 + $0x10] sm:$0xff]
    %v50 = vld [vmem:[%s1 + $0x18] sm:$0xff]
    %v51 = vld [vmem:[%s2] sm:$0x1]
    %v53 = vlaneseq
    %v54 = vshrl.u32 %v53, 7
    %v55 = vsub.s32 0, %v54
    %v56 = vrot.slane %v51, %v55
    %vm58 = vcmask 261120
    %v60 = vsel %vm58, %v45, 0
    %v63 = vsel %vm58, %v46, 0
    %65 = vmatprep.subr.mxu0 0.0
    %66 = vmatpush1.msra.mxu0 %v47
    %67 = vmatprep.subr.mxu0 0.0
    %68 = vmatpush1.msra.mxu0 %v48
    %69 = vmatprep.subr.mxu0 0.0
    %70 = vmatpush1.msra.mxu0 %v49
    %71 = vmatprep.subr.mxu0 0.0
    %72 = vmatpush1.msra.mxu0 %v50
    %73 = vmatprep.subr.mxu0 0.0
    %74 = vmatpush1.msra.mxu0 0.0
    %75 = vmatprep.subr.mxu0 0.0
    %76 = vmatpush1.msra.mxu0 0.0
    %77 = vmatprep.subr.mxu0 0.0
    %78 = vmatpush1.msra.mxu0 0.0
    %79 = vmatprep.subr.mxu0 0.0
    %80 = vmatpush1.msra.mxu0 0.0
    %81 = vmatprep.subr.mxu0 0.0
    %82 = vmatpush1.msra.mxu0 0.0
    %83 = vmatprep.subr.mxu0 0.0
    %84 = vmatpush1.msra.mxu0 0.0
    %85 = vmatprep.subr.mxu0 0.0
    %86 = vmatpush1.msra.mxu0 0.0
    %87 = vmatprep.subr.mxu0 0.0
    %88 = vmatpush1.msra.mxu0 0.0
    %89 = vmatprep.subr.mxu0 0.0
    %90 = vmatpush1.msra.mxu0 0.0
    %91 = vmatprep.subr.mxu0 0.0
    %92 = vmatpush1.msra.mxu0 0.0
    %93 = vmatprep.subr.mxu0 0.0
    %94 = vmatpush1.msra.mxu0 0.0
    %95 = vmatprep.subr.mxu0 0.0
    %96 = vmatpush1.msra.mxu0 0.0
    %97 = vmatprep.subr.mxu0 0.0
    %98 = vmatpush1.msra.mxu0 0.0
    %99 = vmatprep.subr.mxu0 0.0
    %100 = vmatpush1.msra.mxu0 0.0
    %101 = vmatprep.subr.mxu0 0.0
    %102 = vmatpush1.msra.mxu0 0.0
    %103 = vmatprep.subr.mxu0 0.0
    %104 = vmatpush1.msra.mxu0 0.0
    %105 = vmatprep.subr.mxu0 0.0
    %106 = vmatpush1.msra.mxu0 0.0
    %107 = vmatprep.subr.mxu0 0.0
    %108 = vmatpush1.msra.mxu0 0.0
    %109 = vmatprep.subr.mxu0 0.0
    %110 = vmatpush1.msra.mxu0 0.0
    %111 = vmatprep.subr.mxu0 0.0
    %112 = vmatpush1.msra.mxu0 0.0
    %113 = vmatprep.subr.mxu0 0.0
    %114 = vmatpush1.msra.mxu0 0.0
    %115 = vmatprep.subr.mxu0 0.0
    %116 = vmatpush1.msra.mxu0 0.0
    %117 = vmatprep.subr.mxu0 0.0
    %118 = vmatpush1.msra.mxu0 0.0
    %119 = vmatprep.subr.mxu0 0.0
    %120 = vmatpush1.msra.mxu0 0.0
    %121 = vmatprep.subr.mxu0 0.0
    %122 = vmatpush1.msra.mxu0 0.0
    %123 = vmatprep.subr.mxu0 0.0
    %124 = vmatpush1.msra.mxu0 0.0
    %125 = vmatprep.subr.mxu0 0.0
    %126 = vmatpush1.msra.mxu0 0.0
    %127 = vmatprep.subr.mxu0 0.0
    %128 = vmatpush1.msra.mxu0 0.0
    %129 = vmatprep.mubr.f32.mxu0 0.0
    %130 = vmatmul.mubr.f32.gmra.mrb[0].mxu0 %v60
    %v131 = vpop.f32.mrb[0].mxu0
    %v132 = vadd.f32 %v56, %v131
    %v133 = vpop.f32.mrb[0].mxu0
    %134 = vmatprep.mubr.f32.mxu0 0.0
    %135 = vmatmul.mubr.f32.gmra.mrb[0].mxu0 %v63
    %v136 = vpop.f32.mrb[0].mxu0
    %v137 = vadd.f32 %v56, %v136
    %v138 = vpop.f32.mrb[0].mxu0
    %139 = vdwg.mxu0
    %v140 = vmul.f32 %v132, 0.35355338
    %v141 = vmul.f32 %v137, 0.35355338
    %143 = vrot.lane.b32.xlu0 %v132, 96
    %v144 = vpop.permute.xlu0 %143
    %vm145 = vcmask 64512
    %v147 = vsel %vm145, %v140, 0
    %v149 = vsel %vm145, %v144, 0
    %151 = vmatprep.subr.mxu0 0.0
    %152 = vmatpush1.xpose.msra.mxu0 %v149
    %153 = vmatprep.subr.mxu0 0.0
    %154 = vmatpush1.xpose.msra.mxu0 0.0
    %155 = vmatprep.subr.mxu0 0.0
    %156 = vmatpush1.xpose.msra.mxu0 0.0
    %157 = vmatprep.subr.mxu0 0.0
    %158 = vmatpush1.xpose.msra.mxu0 0.0
    %159 = vmatprep.subr.mxu0 0.0
    %160 = vmatpush1.xpose.msra.mxu0 0.0
    %161 = vmatprep.subr.mxu0 0.0
    %162 = vmatpush1.xpose.msra.mxu0 0.0
    %163 = vmatprep.subr.mxu0 0.0
    %164 = vmatpush1.xpose.msra.mxu0 0.0
    %165 = vmatprep.subr.mxu0 0.0
    %166 = vmatpush1.xpose.msra.mxu0 0.0
    %167 = vmatprep.subr.mxu0 0.0
    %168 = vmatpush1.xpose.msra.mxu0 0.0
    %169 = vmatprep.subr.mxu0 0.0
    %170 = vmatpush1.xpose.msra.mxu0 0.0
    %171 = vmatprep.subr.mxu0 0.0
    %172 = vmatpush1.xpose.msra.mxu0 0.0
    %173 = vmatprep.subr.mxu0 0.0
    %174 = vmatpush1.xpose.msra.mxu0 0.0
    %175 = vmatprep.subr.mxu0 0.0
    %176 = vmatpush1.xpose.msra.mxu0 0.0
    %177 = vmatprep.subr.mxu0 0.0
    %178 = vmatpush1.xpose.msra.mxu0 0.0
    %179 = vmatprep.subr.mxu0 0.0
    %180 = vmatpush1.xpose.msra.mxu0 0.0
    %181 = vmatprep.subr.mxu0 0.0
    %182 = vmatpush1.xpose.msra.mxu0 0.0
    %183 = vmatprep.subr.mxu0 0.0
    %184 = vmatpush1.xpose.msra.mxu0 0.0
    %185 = vmatprep.subr.mxu0 0.0
    %186 = vmatpush1.xpose.msra.mxu0 0.0
    %187 = vmatprep.subr.mxu0 0.0
    %188 = vmatpush1.xpose.msra.mxu0 0.0
    %189 = vmatprep.subr.mxu0 0.0
    %190 = vmatpush1.xpose.msra.mxu0 0.0
    %191 = vmatprep.subr.mxu0 0.0
    %192 = vmatpush1.xpose.msra.mxu0 0.0
    %193 = vmatprep.subr.mxu0 0.0
    %194 = vmatpush1.xpose.msra.mxu0 0.0
    %195 = vmatprep.subr.mxu0 0.0
    %196 = vmatpush1.xpose.msra.mxu0 0.0
    %197 = vmatprep.subr.mxu0 0.0
    %198 = vmatpush1.xpose.msra.mxu0 0.0
    %199 = vmatprep.subr.mxu0 0.0
    %200 = vmatpush1.xpose.msra.mxu0 0.0
    %201 = vmatprep.subr.mxu0 0.0
    %202 = vmatpush1.xpose.msra.mxu0 0.0
    %203 = vmatprep.subr.mxu0 0.0
    %204 = vmatpush1.xpose.msra.mxu0 0.0
    %205 = vmatprep.subr.mxu0 0.0
    %206 = vmatpush1.xpose.msra.mxu0 0.0
    %207 = vmatprep.subr.mxu0 0.0
    %208 = vmatpush1.xpose.msra.mxu0 0.0
    %209 = vmatprep.subr.mxu0 0.0
    %210 = vmatpush1.xpose.msra.mxu0 0.0
    %211 = vmatprep.subr.mxu0 0.0
    %212 = vmatpush1.xpose.msra.mxu0 0.0
    %213 = vmatprep.subr.mxu0 0.0
    %214 = vmatpush1.xpose.msra.mxu0 0.0
    %215 = vmatprep.mubr.f32.mxu0 0.0
    %216 = vmatmul.mubr.f32.gmra.mrb[0].mxu0 %v147
    %v217 = vpop.f32.mrb[0].mxu0
    %v218 = vadd.f32 0.0, %v217
    %v219 = vpop.f32.mrb[0].mxu0
    %220 = vdwg.mxu0
    %222 = vrot.lane.b32.xlu0 %v137, 96
    %v223 = vpop.permute.xlu0 %222
    %v225 = vsel %vm145, %v141, 0
    %v227 = vsel %vm145, %v223, 0
    %229 = vmatprep.subr.mxu0 0.0
    %230 = vmatpush1.xpose.msra.mxu0 %v227
    %231 = vmatprep.subr.mxu0 0.0
    %232 = vmatpush1.xpose.msra.mxu0 0.0
    %233 = vmatprep.subr.mxu0 0.0
    %234 = vmatpush1.xpose.msra.mxu0 0.0
    %235 = vmatprep.subr.mxu0 0.0
    %236 = vmatpush1.xpose.msra.mxu0 0.0
    %237 = vmatprep.subr.mxu0 0.0
    %238 = vmatpush1.xpose.msra.mxu0 0.0
    %239 = vmatprep.subr.mxu0 0.0
    %240 = vmatpush1.xpose.msra.mxu0 0.0
    %241 = vmatprep.subr.mxu0 0.0
    %242 = vmatpush1.xpose.msra.mxu0 0.0
    %243 = vmatprep.subr.mxu0 0.0
    %244 = vmatpush1.xpose.msra.mxu0 0.0
    %245 = vmatprep.subr.mxu0 0.0
    %246 = vmatpush1.xpose.msra.mxu0 0.0
    %247 = vmatprep.subr.mxu0 0.0
    %248 = vmatpush1.xpose.msra.mxu0 0.0
    %249 = vmatprep.subr.mxu0 0.0
    %250 = vmatpush1.xpose.msra.mxu0 0.0
    %251 = vmatprep.subr.mxu0 0.0
    %252 = vmatpush1.xpose.msra.mxu0 0.0
    %253 = vmatprep.subr.mxu0 0.0
    %254 = vmatpush1.xpose.msra.mxu0 0.0
    %255 = vmatprep.subr.mxu0 0.0
    %256 = vmatpush1.xpose.msra.mxu0 0.0
    %257 = vmatprep.subr.mxu0 0.0
    %258 = vmatpush1.xpose.msra.mxu0 0.0
    %259 = vmatprep.subr.mxu0 0.0
    %260 = vmatpush1.xpose.msra.mxu0 0.0
    %261 = vmatprep.subr.mxu0 0.0
    %262 = vmatpush1.xpose.msra.mxu0 0.0
    %263 = vmatprep.subr.mxu0 0.0
    %264 = vmatpush1.xpose.msra.mxu0 0.0
    %265 = vmatprep.subr.mxu0 0.0
    %266 = vmatpush1.xpose.msra.mxu0 0.0
    %267 = vmatprep.subr.mxu0 0.0
    %268 = vmatpush1.xpose.msra.mxu0 0.0
    %269 = vmatprep.subr.mxu0 0.0
    %270 = vmatpush1.xpose.msra.mxu0 0.0
    %271 = vmatprep.subr.mxu0 0.0
    %272 = vmatpush1.xpose.msra.mxu0 0.0
    %273 = vmatprep.subr.mxu0 0.0
    %274 = vmatpush1.xpose.msra.mxu0 0.0
    %275 = vmatprep.subr.mxu0 0.0
    %276 = vmatpush1.xpose.msra.mxu0 0.0
    %277 = vmatprep.subr.mxu0 0.0
    %278 = vmatpush1.xpose.msra.mxu0 0.0
    %279 = vmatprep.subr.mxu0 0.0
    %280 = vmatpush1.xpose.msra.mxu0 0.0
    %281 = vmatprep.subr.mxu0 0.0
    %282 = vmatpush1.xpose.msra.mxu0 0.0
    %283 = vmatprep.subr.mxu0 0.0
    %284 = vmatpush1.xpose.msra.mxu0 0.0
    %285 = vmatprep.subr.mxu0 0.0
    %286 = vmatpush1.xpose.msra.mxu0 0.0
    %287 = vmatprep.subr.mxu0 0.0
    %288 = vmatpush1.xpose.msra.mxu0 0.0
    %289 = vmatprep.subr.mxu0 0.0
    %290 = vmatpush1.xpose.msra.mxu0 0.0
    %291 = vmatprep.subr.mxu0 0.0
    %292 = vmatpush1.xpose.msra.mxu0 0.0
    %293 = vmatprep.mubr.f32.mxu0 0.0
    %294 = vmatmul.mubr.f32.gmra.mrb[0].mxu0 %v225
    %v295 = vpop.f32.mrb[0].mxu0
    %v296 = vadd.f32 0.0, %v295
    %v297 = vpop.f32.mrb[0].mxu0
    %298 = vdwg.mxu0
    %v299 = vsel %vm145, %v218, -inf
    %300 = vmax.xlane.f32.xlu0 %v299
    %v301 = vpop.xlane.xlu0 %300
    %v302 = vsel %vm145, %v296, -inf
    %303 = vmax.xlane.f32.xlu0 %v302
    %v304 = vpop.xlane.xlu0 %303
    %v305 = vsub.f32 %v218, %v301
    %v306 = vsub.f32 %v296, %v304
    %v307 = vmul.f32 %v305, 1.442695
    %v308 = vpow.pop %v307
    %v309 = vmul.f32 %v306, 1.442695
    %v310 = vpow.pop %v309
    %v311 = vsel %vm145, %v308, 0.0
    %312 = vadd.xlane.f32.xlu0 %v311
    %v313 = vpop.xlane.xlu0 %312
    %v314 = vsel %vm145, %v310, 0.0
    %315 = vadd.xlane.f32.xlu0 %v314
    %v316 = vpop.xlane.xlu0 %315
    %v317 = vrcp.pop %v313
    %v318 = vrcp.pop %v316
    %v319 = vmul.f32 %v308, %v317
    %v320 = vmul.f32 %v310, %v318
    %321 = vrot.lane.b32.xlu0 %v132, 64
    %v322 = vpop.permute.xlu0 %321
    %v325 = vsel %vm145, %v319, 0
    %327 = vmatprep.subr.mxu0 0.0
    %328 = vmatpush1.msra.mxu0 %v322
    %329 = vmatprep.subr.mxu0 0.0
    %330 = vmatpush1.msra.mxu0 0.0
    %331 = vmatprep.subr.mxu0 0.0
    %332 = vmatpush1.msra.mxu0 0.0
    %333 = vmatprep.subr.mxu0 0.0
    %334 = vmatpush1.msra.mxu0 0.0
    %335 = vmatprep.subr.mxu0 0.0
    %336 = vmatpush1.msra.mxu0 0.0
    %337 = vmatprep.subr.mxu0 0.0
    %338 = vmatpush1.msra.mxu0 0.0
    %339 = vmatprep.subr.mxu0 0.0
    %340 = vmatpush1.msra.mxu0 0.0
    %341 = vmatprep.subr.mxu0 0.0
    %342 = vmatpush1.msra.mxu0 0.0
    %343 = vmatprep.subr.mxu0 0.0
    %344 = vmatpush1.msra.mxu0 0.0
    %345 = vmatprep.subr.mxu0 0.0
    %346 = vmatpush1.msra.mxu0 0.0
    %347 = vmatprep.subr.mxu0 0.0
    %348 = vmatpush1.msra.mxu0 0.0
    %349 = vmatprep.subr.mxu0 0.0
    %350 = vmatpush1.msra.mxu0 0.0
    %351 = vmatprep.subr.mxu0 0.0
    %352 = vmatpush1.msra.mxu0 0.0
    %353 = vmatprep.subr.mxu0 0.0
    %354 = vmatpush1.msra.mxu0 0.0
    %355 = vmatprep.subr.mxu0 0.0
    %356 = vmatpush1.msra.mxu0 0.0
    %357 = vmatprep.subr.mxu0 0.0
    %358 = vmatpush1.msra.mxu0 0.0
    %359 = vmatprep.subr.mxu0 0.0
    %360 = vmatpush1.msra.mxu0 0.0
    %361 = vmatprep.subr.mxu0 0.0
    %362 = vmatpush1.msra.mxu0 0.0
    %363 = vmatprep.subr.mxu0 0.0
    %364 = vmatpush1.msra.mxu0 0.0
    %365 = vmatprep.subr.mxu0 0.0
    %366 = vmatpush1.msra.mxu0 0.0
    %367 = vmatprep.subr.mxu0 0.0
    %368 = vmatpush1.msra.mxu0 0.0
    %369 = vmatprep.subr.mxu0 0.0
    %370 = vmatpush1.msra.mxu0 0.0
    %371 = vmatprep.subr.mxu0 0.0
    %372 = vmatpush1.msra.mxu0 0.0
    %373 = vmatprep.subr.mxu0 0.0
    %374 = vmatpush1.msra.mxu0 0.0
    %375 = vmatprep.subr.mxu0 0.0
    %376 = vmatpush1.msra.mxu0 0.0
    %377 = vmatprep.subr.mxu0 0.0
    %378 = vmatpush1.msra.mxu0 0.0
    %379 = vmatprep.subr.mxu0 0.0
    %380 = vmatpush1.msra.mxu0 0.0
    %381 = vmatprep.subr.mxu0 0.0
    %382 = vmatpush1.msra.mxu0 0.0
    %383 = vmatprep.subr.mxu0 0.0
    %384 = vmatpush1.msra.mxu0 0.0
    %385 = vmatprep.subr.mxu0 0.0
    %386 = vmatpush1.msra.mxu0 0.0
    %387 = vmatprep.subr.mxu0 0.0
    %388 = vmatpush1.msra.mxu0 0.0
    %389 = vmatprep.subr.mxu0 0.0
    %390 = vmatpush1.msra.mxu0 0.0
    %391 = vmatprep.mubr.f32.mxu0 0.0
    %392 = vmatmul.mubr.f32.gmra.mrb[0].mxu0 %v325
    %v393 = vpop.f32.mrb[0].mxu0
    %v394 = vadd.f32 0.0, %v393
    %v395 = vpop.f32.mrb[0].mxu0
    %396 = vdwg.mxu0
    %397 = vrot.lane.b32.xlu0 %v137, 64
    %v398 = vpop.permute.xlu0 %397
    %v401 = vsel %vm145, %v320, 0
    %403 = vmatprep.subr.mxu0 0.0
    %404 = vmatpush1.msra.mxu0 %v398
    %405 = vmatprep.subr.mxu0 0.0
    %406 = vmatpush1.msra.mxu0 0.0
    %407 = vmatprep.subr.mxu0 0.0
    %408 = vmatpush1.msra.mxu0 0.0
    %409 = vmatprep.subr.mxu0 0.0
    %410 = vmatpush1.msra.mxu0 0.0
    %411 = vmatprep.subr.mxu0 0.0
    %412 = vmatpush1.msra.mxu0 0.0
    %413 = vmatprep.subr.mxu0 0.0
    %414 = vmatpush1.msra.mxu0 0.0
    %415 = vmatprep.subr.mxu0 0.0
    %416 = vmatpush1.msra.mxu0 0.0
    %417 = vmatprep.subr.mxu0 0.0
    %418 = vmatpush1.msra.mxu0 0.0
    %419 = vmatprep.subr.mxu0 0.0
    %420 = vmatpush1.msra.mxu0 0.0
    %421 = vmatprep.subr.mxu0 0.0
    %422 = vmatpush1.msra.mxu0 0.0
    %423 = vmatprep.subr.mxu0 0.0
    %424 = vmatpush1.msra.mxu0 0.0
    %425 = vmatprep.subr.mxu0 0.0
    %426 = vmatpush1.msra.mxu0 0.0
    %427 = vmatprep.subr.mxu0 0.0
    %428 = vmatpush1.msra.mxu0 0.0
    %429 = vmatprep.subr.mxu0 0.0
    %430 = vmatpush1.msra.mxu0 0.0
    %431 = vmatprep.subr.mxu0 0.0
    %432 = vmatpush1.msra.mxu0 0.0
    %433 = vmatprep.subr.mxu0 0.0
    %434 = vmatpush1.msra.mxu0 0.0
    %435 = vmatprep.subr.mxu0 0.0
    %436 = vmatpush1.msra.mxu0 0.0
    %437 = vmatprep.subr.mxu0 0.0
    %438 = vmatpush1.msra.mxu0 0.0
    %439 = vmatprep.subr.mxu0 0.0
    %440 = vmatpush1.msra.mxu0 0.0
    %441 = vmatprep.subr.mxu0 0.0
    %442 = vmatpush1.msra.mxu0 0.0
    %443 = vmatprep.subr.mxu0 0.0
    %444 = vmatpush1.msra.mxu0 0.0
    %445 = vmatprep.subr.mxu0 0.0
    %446 = vmatpush1.msra.mxu0 0.0
    %447 = vmatprep.subr.mxu0 0.0
    %448 = vmatpush1.msra.mxu0 0.0
    %449 = vmatprep.subr.mxu0 0.0
    %450 = vmatpush1.msra.mxu0 0.0
    %451 = vmatprep.subr.mxu0 0.0
    %452 = vmatpush1.msra.mxu0 0.0
    %453 = vmatprep.subr.mxu0 0.0
    %454 = vmatpush1.msra.mxu0 0.0
    %455 = vmatprep.subr.mxu0 0.0
    %456 = vmatpush1.msra.mxu0 0.0
    %457 = vmatprep.subr.mxu0 0.0
    %458 = vmatpush1.msra.mxu0 0.0
    %459 = vmatprep.subr.mxu0 0.0
    %460 = vmatpush1.msra.mxu0 0.0
    %461 = vmatprep.subr.mxu0 0.0
    %462 = vmatpush1.msra.mxu0 0.0
    %463 = vmatprep.subr.mxu0 0.0
    %464 = vmatpush1.msra.mxu0 0.0
    %465 = vmatprep.subr.mxu0 0.0
    %466 = vmatpush1.msra.mxu0 0.0
    %467 = vmatprep.mubr.f32.mxu0 0.0
    %468 = vmatmul.mubr.f32.gmra.mrb[0].mxu0 %v401
    %v469 = vpop.f32.mrb[0].mxu0
    %v470 = vadd.f32 0.0, %v469
    %v471 = vpop.f32.mrb[0].mxu0
    %472 = vdwg.mxu0
    %473 = vst.msk [vmem:[#allocation2] sm:$0xff] %vm145, %v394
    %474 = vst.msk [vmem:[#allocation2 + $0x8] sm:$0xff] %vm145, %v470
    %475 = vrot.lane.b32.xlu0 %v140, 120
    %v476 = vpop.permute.xlu0 %475
    %477 = vrot.lane.b32.xlu0 %v132, 88
    %v478 = vpop.permute.xlu0 %477
    %v479 = vsel %vm145, %v476, 0
    %v481 = vsel %vm145, %v478, 0
    %483 = vmatprep.subr.mxu0 0.0
    %484 = vmatpush1.xpose.msra.mxu0 %v481
    %485 = vmatprep.subr.mxu0 0.0
    %486 = vmatpush1.xpose.msra.mxu0 0.0
    %487 = vmatprep.subr.mxu0 0.0
    %488 = vmatpush1.xpose.msra.mxu0 0.0
    %489 = vmatprep.subr.mxu0 0.0
    %490 = vmatpush1.xpose.msra.mxu0 0.0
    %491 = vmatprep.subr.mxu0 0.0
    %492 = vmatpush1.xpose.msra.mxu0 0.0
    %493 = vmatprep.subr.mxu0 0.0
    %494 = vmatpush1.xpose.msra.mxu0 0.0
    %495 = vmatprep.subr.mxu0 0.0
    %496 = vmatpush1.xpose.msra.mxu0 0.0
    %497 = vmatprep.subr.mxu0 0.0
    %498 = vmatpush1.xpose.msra.mxu0 0.0
    %499 = vmatprep.subr.mxu0 0.0
    %500 = vmatpush1.xpose.msra.mxu0 0.0
    %501 = vmatprep.subr.mxu0 0.0
    %502 = vmatpush1.xpose.msra.mxu0 0.0
    %503 = vmatprep.subr.mxu0 0.0
    %504 = vmatpush1.xpose.msra.mxu0 0.0
    %505 = vmatprep.subr.mxu0 0.0
    %506 = vmatpush1.xpose.msra.mxu0 0.0
    %507 = vmatprep.subr.mxu0 0.0
    %508 = vmatpush1.xpose.msra.mxu0 0.0
    %509 = vmatprep.subr.mxu0 0.0
    %510 = vmatpush1.xpose.msra.mxu0 0.0
    %511 = vmatprep.subr.mxu0 0.0
    %512 = vmatpush1.xpose.msra.mxu0 0.0
    %513 = vmatprep.subr.mxu0 0.0
    %514 = vmatpush1.xpose.msra.mxu0 0.0
    %515 = vmatprep.subr.mxu0 0.0
    %516 = vmatpush1.xpose.msra.mxu0 0.0
    %517 = vmatprep.subr.mxu0 0.0
    %518 = vmatpush1.xpose.msra.mxu0 0.0
    %519 = vmatprep.subr.mxu0 0.0
    %520 = vmatpush1.xpose.msra.mxu0 0.0
    %521 = vmatprep.subr.mxu0 0.0
    %522 = vmatpush1.xpose.msra.mxu0 0.0
    %523 = vmatprep.subr.mxu0 0.0
    %524 = vmatpush1.xpose.msra.mxu0 0.0
    %525 = vmatprep.subr.mxu0 0.0
    %526 = vmatpush1.xpose.msra.mxu0 0.0
    %527 = vmatprep.subr.mxu0 0.0
    %528 = vmatpush1.xpose.msra.mxu0 0.0
    %529 = vmatprep.subr.mxu0 0.0
    %530 = vmatpush1.xpose.msra.mxu0 0.0
    %531 = vmatprep.subr.mxu0 0.0
    %532 = vmatpush1.xpose.msra.mxu0 0.0
    %533 = vmatprep.subr.mxu0 0.0
    %534 = vmatpush1.xpose.msra.mxu0 0.0
    %535 = vmatprep.subr.mxu0 0.0
    %536 = vmatpush1.xpose.msra.mxu0 0.0
    %537 = vmatprep.subr.mxu0 0.0
    %538 = vmatpush1.xpose.msra.mxu0 0.0
    %539 = vmatprep.subr.mxu0 0.0
    %540 = vmatpush1.xpose.msra.mxu0 0.0
    %541 = vmatprep.subr.mxu0 0.0
    %542 = vmatpush1.xpose.msra.mxu0 0.0
    %543 = vmatprep.subr.mxu0 0.0
    %544 = vmatpush1.xpose.msra.mxu0 0.0
    %545 = vmatprep.subr.mxu0 0.0
    %546 = vmatpush1.xpose.msra.mxu0 0.0
    %547 = vmatprep.mubr.f32.mxu0 0.0
    %548 = vmatmul.mubr.f32.gmra.mrb[0].mxu0 %v479
    %v549 = vpop.f32.mrb[0].mxu0
    %v550 = vadd.f32 0.0, %v549
    %v551 = vpop.f32.mrb[0].mxu0
    %552 = vdwg.mxu0
    %553 = vrot.lane.b32.xlu0 %v141, 120
    %v554 = vpop.permute.xlu0 %553
    %555 = vrot.lane.b32.xlu0 %v137, 88
    %v556 = vpop.permute.xlu0 %555
    %v557 = vsel %vm145, %v554, 0
    %v559 = vsel %vm145, %v556, 0
    %561 = vmatprep.subr.mxu0 0.0
    %562 = vmatpush1.xpose.msra.mxu0 %v559
    %563 = vmatprep.subr.mxu0 0.0
    %564 = vmatpush1.xpose.msra.mxu0 0.0
    %565 = vmatprep.subr.mxu0 0.0
    %566 = vmatpush1.xpose.msra.mxu0 0.0
    %567 = vmatprep.subr.mxu0 0.0
    %568 = vmatpush1.xpose.msra.mxu0 0.0
    %569 = vmatprep.subr.mxu0 0.0
    %570 = vmatpush1.xpose.msra.mxu0 0.0
    %571 = vmatprep.subr.mxu0 0.0
    %572 = vmatpush1.xpose.msra.mxu0 0.0
    %573 = vmatprep.subr.mxu0 0.0
    %574 = vmatpush1.xpose.msra.mxu0 0.0
    %575 = vmatprep.subr.mxu0 0.0
    %576 = vmatpush1.xpose.msra.mxu0 0.0
    %577 = vmatprep.subr.mxu0 0.0
    %578 = vmatpush1.xpose.msra.mxu0 0.0
    %579 = vmatprep.subr.mxu0 0.0
    %580 = vmatpush1.xpose.msra.mxu0 0.0
    %581 = vmatprep.subr.mxu0 0.0
    %582 = vmatpush1.xpose.msra.mxu0 0.0
    %583 = vmatprep.subr.mxu0 0.0
    %584 = vmatpush1.xpose.msra.mxu0 0.0
    %585 = vmatprep.subr.mxu0 0.0
    %586 = vmatpush1.xpose.msra.mxu0 0.0
    %587 = vmatprep.subr.mxu0 0.0
    %588 = vmatpush1.xpose.msra.mxu0 0.0
    %589 = vmatprep.subr.mxu0 0.0
    %590 = vmatpush1.xpose.msra.mxu0 0.0
    %591 = vmatprep.subr.mxu0 0.0
    %592 = vmatpush1.xpose.msra.mxu0 0.0
    %593 = vmatprep.subr.mxu0 0.0
    %594 = vmatpush1.xpose.msra.mxu0 0.0
    %595 = vmatprep.subr.mxu0 0.0
    %596 = vmatpush1.xpose.msra.mxu0 0.0
    %597 = vmatprep.subr.mxu0 0.0
    %598 = vmatpush1.xpose.msra.mxu0 0.0
    %599 = vmatprep.subr.mxu0 0.0
    %600 = vmatpush1.xpose.msra.mxu0 0.0
    %601 = vmatprep.subr.mxu0 0.0
    %602 = vmatpush1.xpose.msra.mxu0 0.0
    %603 = vmatprep.subr.mxu0 0.0
    %604 = vmatpush1.xpose.msra.mxu0 0.0
    %605 = vmatprep.subr.mxu0 0.0
    %606 = vmatpush1.xpose.msra.mxu0 0.0
    %607 = vmatprep.subr.mxu0 0.0
    %608 = vmatpush1.xpose.msra.mxu0 0.0
    %609 = vmatprep.subr.mxu0 0.0
    %610 = vmatpush1.xpose.msra.mxu0 0.0
    %611 = vmatprep.subr.mxu0 0.0
    %612 = vmatpush1.xpose.msra.mxu0 0.0
    %613 = vmatprep.subr.mxu0 0.0
    %614 = vmatpush1.xpose.msra.mxu0 0.0
    %615 = vmatprep.subr.mxu0 0.0
    %616 = vmatpush1.xpose.msra.mxu0 0.0
    %617 = vmatprep.subr.mxu0 0.0
    %618 = vmatpush1.xpose.msra.mxu0 0.0
    %619 = vmatprep.subr.mxu0 0.0
    %620 = vmatpush1.xpose.msra.mxu0 0.0
    %621 = vmatprep.subr.mxu0 0.0
    %622 = vmatpush1.xpose.msra.mxu0 0.0
    %623 = vmatprep.subr.mxu0 0.0
    %624 = vmatpush1.xpose.msra.mxu0 0.0
    %625 = vmatprep.mubr.f32.mxu0 0.0
    %626 = vmatmul.mubr.f32.gmra.mrb[0].mxu0 %v557
    %v627 = vpop.f32.mrb[0].mxu0
    %v628 = vadd.f32 0.0, %v627
    %v629 = vpop.f32.mrb[0].mxu0
    %630 = vdwg.mxu0
    %v631 = vsel %vm145, %v550, -inf
    %632 = vmax.xlane.f32.xlu0 %v631
    %v633 = vpop.xlane.xlu0 %632
    %v634 = vsel %vm145, %v628, -inf
    %635 = vmax.xlane.f32.xlu0 %v634
    %v636 = vpop.xlane.xlu0 %635
    %v637 = vsub.f32 %v550, %v633
    %v638 = vsub.f32 %v628, %v636
    %v639 = vmul.f32 %v637, 1.442695
    %v640 = vpow.pop %v639
    %v641 = vmul.f32 %v638, 1.442695
    %v642 = vpow.pop %v641
    %v643 = vsel %vm145, %v640, 0.0
    %644 = vadd.xlane.f32.xlu0 %v643
    %v645 = vpop.xlane.xlu0 %644
    %v646 = vsel %vm145, %v642, 0.0
    %647 = vadd.xlane.f32.xlu0 %v646
    %v648 = vpop.xlane.xlu0 %647
    %v649 = vrcp.pop %v645
    %v650 = vrcp.pop %v648
    %v651 = vmul.f32 %v640, %v649
    %v652 = vmul.f32 %v642, %v650
    %653 = vrot.lane.b32.xlu0 %v132, 56
    %v654 = vpop.permute.xlu0 %653
    %v657 = vsel %vm145, %v651, 0
    %659 = vmatprep.subr.mxu0 0.0
    %660 = vmatpush1.msra.mxu0 %v654
    %661 = vmatprep.subr.mxu0 0.0
    %662 = vmatpush1.msra.mxu0 0.0
    %663 = vmatprep.subr.mxu0 0.0
    %664 = vmatpush1.msra.mxu0 0.0
    %665 = vmatprep.subr.mxu0 0.0
    %666 = vmatpush1.msra.mxu0 0.0
    %667 = vmatprep.subr.mxu0 0.0
    %668 = vmatpush1.msra.mxu0 0.0
    %669 = vmatprep.subr.mxu0 0.0
    %670 = vmatpush1.msra.mxu0 0.0
    %671 = vmatprep.subr.mxu0 0.0
    %672 = vmatpush1.msra.mxu0 0.0
    %673 = vmatprep.subr.mxu0 0.0
    %674 = vmatpush1.msra.mxu0 0.0
    %675 = vmatprep.subr.mxu0 0.0
    %676 = vmatpush1.msra.mxu0 0.0
    %677 = vmatprep.subr.mxu0 0.0
    %678 = vmatpush1.msra.mxu0 0.0
    %679 = vmatprep.subr.mxu0 0.0
    %680 = vmatpush1.msra.mxu0 0.0
    %681 = vmatprep.subr.mxu0 0.0
    %682 = vmatpush1.msra.mxu0 0.0
    %683 = vmatprep.subr.mxu0 0.0
    %684 = vmatpush1.msra.mxu0 0.0
    %685 = vmatprep.subr.mxu0 0.0
    %686 = vmatpush1.msra.mxu0 0.0
    %687 = vmatprep.subr.mxu0 0.0
    %688 = vmatpush1.msra.mxu0 0.0
    %689 = vmatprep.subr.mxu0 0.0
    %690 = vmatpush1.msra.mxu0 0.0
    %691 = vmatprep.subr.mxu0 0.0
    %692 = vmatpush1.msra.mxu0 0.0
    %693 = vmatprep.subr.mxu0 0.0
    %694 = vmatpush1.msra.mxu0 0.0
    %695 = vmatprep.subr.mxu0 0.0
    %696 = vmatpush1.msra.mxu0 0.0
    %697 = vmatprep.subr.mxu0 0.0
    %698 = vmatpush1.msra.mxu0 0.0
    %699 = vmatprep.subr.mxu0 0.0
    %700 = vmatpush1.msra.mxu0 0.0
    %701 = vmatprep.subr.mxu0 0.0
    %702 = vmatpush1.msra.mxu0 0.0
    %703 = vmatprep.subr.mxu0 0.0
    %704 = vmatpush1.msra.mxu0 0.0
    %705 = vmatprep.subr.mxu0 0.0
    %706 = vmatpush1.msra.mxu0 0.0
    %707 = vmatprep.subr.mxu0 0.0
    %708 = vmatpush1.msra.mxu0 0.0
    %709 = vmatprep.subr.mxu0 0.0
    %710 = vmatpush1.msra.mxu0 0.0
    %711 = vmatprep.subr.mxu0 0.0
    %712 = vmatpush1.msra.mxu0 0.0
    %713 = vmatprep.subr.mxu0 0.0
    %714 = vmatpush1.msra.mxu0 0.0
    %715 = vmatprep.subr.mxu0 0.0
    %716 = vmatpush1.msra.mxu0 0.0
    %717 = vmatprep.subr.mxu0 0.0
    %718 = vmatpush1.msra.mxu0 0.0
    %719 = vmatprep.subr.mxu0 0.0
    %720 = vmatpush1.msra.mxu0 0.0
    %721 = vmatprep.subr.mxu0 0.0
    %722 = vmatpush1.msra.mxu0 0.0
    %723 = vmatprep.mubr.f32.mxu0 0.0
    %724 = vmatmul.mubr.f32.gmra.mrb[0].mxu0 %v657
    %v725 = vpop.f32.mrb[0].mxu0
    %v726 = vadd.f32 0.0, %v725
    %v727 = vpop.f32.mrb[0].mxu0
    %728 = vdwg.mxu0
    %729 = vrot.lane.b32.xlu0 %v137, 56
    %v730 = vpop.permute.xlu0 %729
    %v733 = vsel %vm145, %v652, 0
    %735 = vmatprep.subr.mxu0 0.0
    %736 = vmatpush1.msra.mxu0 %v730
    %737 = vmatprep.subr.mxu0 0.0
    %738 = vmatpush1.msra.mxu0 0.0
    %739 = vmatprep.subr.mxu0 0.0
    %740 = vmatpush1.msra.mxu0 0.0
    %741 = vmatprep.subr.mxu0 0.0
    %742 = vmatpush1.msra.mxu0 0.0
    %743 = vmatprep.subr.mxu0 0.0
    %744 = vmatpush1.msra.mxu0 0.0
    %745 = vmatprep.subr.mxu0 0.0
    %746 = vmatpush1.msra.mxu0 0.0
    %747 = vmatprep.subr.mxu0 0.0
    %748 = vmatpush1.msra.mxu0 0.0
    %749 = vmatprep.subr.mxu0 0.0
    %750 = vmatpush1.msra.mxu0 0.0
    %751 = vmatprep.subr.mxu0 0.0
    %752 = vmatpush1.msra.mxu0 0.0
    %753 = vmatprep.subr.mxu0 0.0
    %754 = vmatpush1.msra.mxu0 0.0
    %755 = vmatprep.subr.mxu0 0.0
    %756 = vmatpush1.msra.mxu0 0.0
    %757 = vmatprep.subr.mxu0 0.0
    %758 = vmatpush1.msra.mxu0 0.0
    %759 = vmatprep.subr.mxu0 0.0
    %760 = vmatpush1.msra.mxu0 0.0
    %761 = vmatprep.subr.mxu0 0.0
    %762 = vmatpush1.msra.mxu0 0.0
    %763 = vmatprep.subr.mxu0 0.0
    %764 = vmatpush1.msra.mxu0 0.0
    %765 = vmatprep.subr.mxu0 0.0
    %766 = vmatpush1.msra.mxu0 0.0
    %767 = vmatprep.subr.mxu0 0.0
    %768 = vmatpush1.msra.mxu0 0.0
    %769 = vmatprep.subr.mxu0 0.0
    %770 = vmatpush1.msra.mxu0 0.0
    %771 = vmatprep.subr.mxu0 0.0
    %772 = vmatpush1.msra.mxu0 0.0
    %773 = vmatprep.subr.mxu0 0.0
    %774 = vmatpush1.msra.mxu0 0.0
    %775 = vmatprep.subr.mxu0 0.0
    %776 = vmatpush1.msra.mxu0 0.0
    %777 = vmatprep.subr.mxu0 0.0
    %778 = vmatpush1.msra.mxu0 0.0
    %779 = vmatprep.subr.mxu0 0.0
    %780 = vmatpush1.msra.mxu0 0.0
    %781 = vmatprep.subr.mxu0 0.0
    %782 = vmatpush1.msra.mxu0 0.0
    %783 = vmatprep.subr.mxu0 0.0
    %784 = vmatpush1.msra.mxu0 0.0
    %785 = vmatprep.subr.mxu0 0.0
    %786 = vmatpush1.msra.mxu0 0.0
    %787 = vmatprep.subr.mxu0 0.0
    %788 = vmatpush1.msra.mxu0 0.0
    %789 = vmatprep.subr.mxu0 0.0
    %790 = vmatpush1.msra.mxu0 0.0
    %791 = vmatprep.subr.mxu0 0.0
    %792 = vmatpush1.msra.mxu0 0.0
    %793 = vmatprep.subr.mxu0 0.0
    %794 = vmatpush1.msra.mxu0 0.0
    %795 = vmatprep.subr.mxu0 0.0
    %796 = vmatpush1.msra.mxu0 0.0
    %797 = vmatprep.subr.mxu0 0.0
    %798 = vmatpush1.msra.mxu0 0.0
    %799 = vmatprep.mubr.f32.mxu0 0.0
    %800 = vmatmul.mubr.f32.gmra.mrb[0].mxu0 %v733
    %v801 = vpop.f32.mrb[0].mxu0
    %v802 = vadd.f32 0.0, %v801
    %v803 = vpop.f32.mrb[0].mxu0
    %804 = vdwg.mxu0
    %807 = vrot.lane.b32.xlu0 %v726, 8
    %v808 = vpop.permute.xlu0 %807
    %809 = vrot.lane.b32.xlu0 %v802, 8
    %v810 = vpop.permute.xlu0 %809
    %vm813 = vcmask 130112
    %814 = vst.msk [vmem:[#allocation2] sm:$0xff] %vm813, %v808
    %815 = vst.msk [vmem:[#allocation2 + $0x8] sm:$0xff] %vm813, %v810
    %816 = vrot.lane.b32.xlu0 %v140, 112
    %v817 = vpop.permute.xlu0 %816
    %818 = vrot.lane.b32.xlu0 %v132, 80
    %v819 = vpop.permute.xlu0 %818
    %v820 = vsel %vm145, %v817, 0
    %v822 = vsel %vm145, %v819, 0
    %824 = vmatprep.subr.mxu0 0.0
    %825 = vmatpush1.xpose.msra.mxu0 %v822
    %826 = vmatprep.subr.mxu0 0.0
    %827 = vmatpush1.xpose.msra.mxu0 0.0
    %828 = vmatprep.subr.mxu0 0.0
    %829 = vmatpush1.xpose.msra.mxu0 0.0
    %830 = vmatprep.subr.mxu0 0.0
    %831 = vmatpush1.xpose.msra.mxu0 0.0
    %832 = vmatprep.subr.mxu0 0.0
    %833 = vmatpush1.xpose.msra.mxu0 0.0
    %834 = vmatprep.subr.mxu0 0.0
    %835 = vmatpush1.xpose.msra.mxu0 0.0
    %836 = vmatprep.subr.mxu0 0.0
    %837 = vmatpush1.xpose.msra.mxu0 0.0
    %838 = vmatprep.subr.mxu0 0.0
    %839 = vmatpush1.xpose.msra.mxu0 0.0
    %840 = vmatprep.subr.mxu0 0.0
    %841 = vmatpush1.xpose.msra.mxu0 0.0
    %842 = vmatprep.subr.mxu0 0.0
    %843 = vmatpush1.xpose.msra.mxu0 0.0
    %844 = vmatprep.subr.mxu0 0.0
    %845 = vmatpush1.xpose.msra.mxu0 0.0
    %846 = vmatprep.subr.mxu0 0.0
    %847 = vmatpush1.xpose.msra.mxu0 0.0
    %848 = vmatprep.subr.mxu0 0.0
    %849 = vmatpush1.xpose.msra.mxu0 0.0
    %850 = vmatprep.subr.mxu0 0.0
    %851 = vmatpush1.xpose.msra.mxu0 0.0
    %852 = vmatprep.subr.mxu0 0.0
    %853 = vmatpush1.xpose.msra.mxu0 0.0
    %854 = vmatprep.subr.mxu0 0.0
    %855 = vmatpush1.xpose.msra.mxu0 0.0
    %856 = vmatprep.subr.mxu0 0.0
    %857 = vmatpush1.xpose.msra.mxu0 0.0
    %858 = vmatprep.subr.mxu0 0.0
    %859 = vmatpush1.xpose.msra.mxu0 0.0
    %860 = vmatprep.subr.mxu0 0.0
    %861 = vmatpush1.xpose.msra.mxu0 0.0
    %862 = vmatprep.subr.mxu0 0.0
    %863 = vmatpush1.xpose.msra.mxu0 0.0
    %864 = vmatprep.subr.mxu0 0.0
    %865 = vmatpush1.xpose.msra.mxu0 0.0
    %866 = vmatprep.subr.mxu0 0.0
    %867 = vmatpush1.xpose.msra.mxu0 0.0
    %868 = vmatprep.subr.mxu0 0.0
    %869 = vmatpush1.xpose.msra.mxu0 0.0
    %870 = vmatprep.subr.mxu0 0.0
    %871 = vmatpush1.xpose.msra.mxu0 0.0
    %872 = vmatprep.subr.mxu0 0.0
    %873 = vmatpush1.xpose.msra.mxu0 0.0
    %874 = vmatprep.subr.mxu0 0.0
    %875 = vmatpush1.xpose.msra.mxu0 0.0
    %876 = vmatprep.subr.mxu0 0.0
    %877 = vmatpush1.xpose.msra.mxu0 0.0
    %878 = vmatprep.subr.mxu0 0.0
    %879 = vmatpush1.xpose.msra.mxu0 0.0
    %880 = vmatprep.subr.mxu0 0.0
    %881 = vmatpush1.xpose.msra.mxu0 0.0
    %882 = vmatprep.subr.mxu0 0.0
    %883 = vmatpush1.xpose.msra.mxu0 0.0
    %884 = vmatprep.subr.mxu0 0.0
    %885 = vmatpush1.xpose.msra.mxu0 0.0
    %886 = vmatprep.subr.mxu0 0.0
    %887 = vmatpush1.xpose.msra.mxu0 0.0
    %888 = vmatprep.mubr.f32.mxu0 0.0
    %889 = vmatmul.mubr.f32.gmra.mrb[0].mxu0 %v820
    %v890 = vpop.f32.mrb[0].mxu0
    %v891 = vadd.f32 0.0, %v890
    %v892 = vpop.f32.mrb[0].mxu0
    %893 = vdwg.mxu0
    %894 = vrot.lane.b32.xlu0 %v141, 112
    %v895 = vpop.permute.xlu0 %894
    %896 = vrot.lane.b32.xlu0 %v137, 80
    %v897 = vpop.permute.xlu0 %896
    %v898 = vsel %vm145, %v895, 0
    %v900 = vsel %vm145, %v897, 0
    %902 = vmatprep.subr.mxu0 0.0
    %903 = vmatpush1.xpose.msra.mxu0 %v900
    %904 = vmatprep.subr.mxu0 0.0
    %905 = vmatpush1.xpose.msra.mxu0 0.0
    %906 = vmatprep.subr.mxu0 0.0
    %907 = vmatpush1.xpose.msra.mxu0 0.0
    %908 = vmatprep.subr.mxu0 0.0
    %909 = vmatpush1.xpose.msra.mxu0 0.0
    %910 = vmatprep.subr.mxu0 0.0
    %911 = vmatpush1.xpose.msra.mxu0 0.0
    %912 = vmatprep.subr.mxu0 0.0
    %913 = vmatpush1.xpose.msra.mxu0 0.0
    %914 = vmatprep.subr.mxu0 0.0
    %915 = vmatpush1.xpose.msra.mxu0 0.0
    %916 = vmatprep.subr.mxu0 0.0
    %917 = vmatpush1.xpose.msra.mxu0 0.0
    %918 = vmatprep.subr.mxu0 0.0
    %919 = vmatpush1.xpose.msra.mxu0 0.0
    %920 = vmatprep.subr.mxu0 0.0
    %921 = vmatpush1.xpose.msra.mxu0 0.0
    %922 = vmatprep.subr.mxu0 0.0
    %923 = vmatpush1.xpose.msra.mxu0 0.0
    %924 = vmatprep.subr.mxu0 0.0
    %925 = vmatpush1.xpose.msra.mxu0 0.0
    %926 = vmatprep.subr.mxu0 0.0
    %927 = vmatpush1.xpose.msra.mxu0 0.0
    %928 = vmatprep.subr.mxu0 0.0
    %929 = vmatpush1.xpose.msra.mxu0 0.0
    %930 = vmatprep.subr.mxu0 0.0
    %931 = vmatpush1.xpose.msra.mxu0 0.0
    %932 = vmatprep.subr.mxu0 0.0
    %933 = vmatpush1.xpose.msra.mxu0 0.0
    %934 = vmatprep.subr.mxu0 0.0
    %935 = vmatpush1.xpose.msra.mxu0 0.0
    %936 = vmatprep.subr.mxu0 0.0
    %937 = vmatpush1.xpose.msra.mxu0 0.0
    %938 = vmatprep.subr.mxu0 0.0
    %939 = vmatpush1.xpose.msra.mxu0 0.0
    %940 = vmatprep.subr.mxu0 0.0
    %941 = vmatpush1.xpose.msra.mxu0 0.0
    %942 = vmatprep.subr.mxu0 0.0
    %943 = vmatpush1.xpose.msra.mxu0 0.0
    %944 = vmatprep.subr.mxu0 0.0
    %945 = vmatpush1.xpose.msra.mxu0 0.0
    %946 = vmatprep.subr.mxu0 0.0
    %947 = vmatpush1.xpose.msra.mxu0 0.0
    %948 = vmatprep.subr.mxu0 0.0
    %949 = vmatpush1.xpose.msra.mxu0 0.0
    %950 = vmatprep.subr.mxu0 0.0
    %951 = vmatpush1.xpose.msra.mxu0 0.0
    %952 = vmatprep.subr.mxu0 0.0
    %953 = vmatpush1.xpose.msra.mxu0 0.0
    %954 = vmatprep.subr.mxu0 0.0
    %955 = vmatpush1.xpose.msra.mxu0 0.0
    %956 = vmatprep.subr.mxu0 0.0
    %957 = vmatpush1.xpose.msra.mxu0 0.0
    %958 = vmatprep.subr.mxu0 0.0
    %959 = vmatpush1.xpose.msra.mxu0 0.0
    %960 = vmatprep.subr.mxu0 0.0
    %961 = vmatpush1.xpose.msra.mxu0 0.0
    %962 = vmatprep.subr.mxu0 0.0
    %963 = vmatpush1.xpose.msra.mxu0 0.0
    %964 = vmatprep.subr.mxu0 0.0
    %965 = vmatpush1.xpose.msra.mxu0 0.0
    %966 = vmatprep.mubr.f32.mxu0 0.0
    %967 = vmatmul.mubr.f32.gmra.mrb[0].mxu0 %v898
    %v968 = vpop.f32.mrb[0].mxu0
    %v969 = vadd.f32 0.0, %v968
    %v970 = vpop.f32.mrb[0].mxu0
    %971 = vdwg.mxu0
    %v972 = vsel %vm145, %v891, -inf
    %973 = vmax.xlane.f32.xlu0 %v972
    %v974 = vpop.xlane.xlu0 %973
    %v975 = vsel %vm145, %v969, -inf
    %976 = vmax.xlane.f32.xlu0 %v975
    %v977 = vpop.xlane.xlu0 %976
    %v978 = vsub.f32 %v891, %v974
    %v979 = vsub.f32 %v969, %v977
    %v980 = vmul.f32 %v978, 1.442695
    %v981 = vpow.pop %v980
    %v982 = vmul.f32 %v979, 1.442695
    %v983 = vpow.pop %v982
    %v984 = vsel %vm145, %v981, 0.0
    %985 = vadd.xlane.f32.xlu0 %v984
    %v986 = vpop.xlane.xlu0 %985
    %v987 = vsel %vm145, %v983, 0.0
    %988 = vadd.xlane.f32.xlu0 %v987
    %v989 = vpop.xlane.xlu0 %988
    %v990 = vrcp.pop %v986
    %v991 = vrcp.pop %v989
    %v992 = vmul.f32 %v981, %v990
    %v993 = vmul.f32 %v983, %v991
    %994 = vrot.lane.b32.xlu0 %v132, 48
    %v995 = vpop.permute.xlu0 %994
    %v998 = vsel %vm145, %v992, 0
    %1000 = vmatprep.subr.mxu0 0.0
    %1001 = vmatpush1.msra.mxu0 %v995
    %1002 = vmatprep.subr.mxu0 0.0
    %1003 = vmatpush1.msra.mxu0 0.0
    %1004 = vmatprep.subr.mxu0 0.0
    %1005 = vmatpush1.msra.mxu0 0.0
    %1006 = vmatprep.subr.mxu0 0.0
    %1007 = vmatpush1.msra.mxu0 0.0
    %1008 = vmatprep.subr.mxu0 0.0
    %1009 = vmatpush1.msra.mxu0 0.0
    %1010 = vmatprep.subr.mxu0 0.0
    %1011 = vmatpush1.msra.mxu0 0.0
    %1012 = vmatprep.subr.mxu0 0.0
    %1013 = vmatpush1.msra.mxu0 0.0
    %1014 = vmatprep.subr.mxu0 0.0
    %1015 = vmatpush1.msra.mxu0 0.0
    %1016 = vmatprep.subr.mxu0 0.0
    %1017 = vmatpush1.msra.mxu0 0.0
    %1018 = vmatprep.subr.mxu0 0.0
    %1019 = vmatpush1.msra.mxu0 0.0
    %1020 = vmatprep.subr.mxu0 0.0
    %1021 = vmatpush1.msra.mxu0 0.0
    %1022 = vmatprep.subr.mxu0 0.0
    %1023 = vmatpush1.msra.mxu0 0.0
    %1024 = vmatprep.subr.mxu0 0.0
    %1025 = vmatpush1.msra.mxu0 0.0
    %1026 = vmatprep.subr.mxu0 0.0
    %1027 = vmatpush1.msra.mxu0 0.0
    %1028 = vmatprep.subr.mxu0 0.0
    %1029 = vmatpush1.msra.mxu0 0.0
    %1030 = vmatprep.subr.mxu0 0.0
    %1031 = vmatpush1.msra.mxu0 0.0
    %1032 = vmatprep.subr.mxu0 0.0
    %1033 = vmatpush1.msra.mxu0 0.0
    %1034 = vmatprep.subr.mxu0 0.0
    %1035 = vmatpush1.msra.mxu0 0.0
    %1036 = vmatprep.subr.mxu0 0.0
    %1037 = vmatpush1.msra.mxu0 0.0
    %1038 = vmatprep.subr.mxu0 0.0
    %1039 = vmatpush1.msra.mxu0 0.0
    %1040 = vmatprep.subr.mxu0 0.0
    %1041 = vmatpush1.msra.mxu0 0.0
    %1042 = vmatprep.subr.mxu0 0.0
    %1043 = vmatpush1.msra.mxu0 0.0
    %1044 = vmatprep.subr.mxu0 0.0
    %1045 = vmatpush1.msra.mxu0 0.0
    %1046 = vmatprep.subr.mxu0 0.0
    %1047 = vmatpush1.msra.mxu0 0.0
    %1048 = vmatprep.subr.mxu0 0.0
    %1049 = vmatpush1.msra.mxu0 0.0
    %1050 = vmatprep.subr.mxu0 0.0
    %1051 = vmatpush1.msra.mxu0 0.0
    %1052 = vmatprep.subr.mxu0 0.0
    %1053 = vmatpush1.msra.mxu0 0.0
    %1054 = vmatprep.subr.mxu0 0.0
    %1055 = vmatpush1.msra.mxu0 0.0
    %1056 = vmatprep.subr.mxu0 0.0
    %1057 = vmatpush1.msra.mxu0 0.0
    %1058 = vmatprep.subr.mxu0 0.0
    %1059 = vmatpush1.msra.mxu0 0.0
    %1060 = vmatprep.subr.mxu0 0.0
    %1061 = vmatpush1.msra.mxu0 0.0
    %1062 = vmatprep.subr.mxu0 0.0
    %1063 = vmatpush1.msra.mxu0 0.0
    %1064 = vmatprep.mubr.f32.mxu0 0.0
    %1065 = vmatmul.mubr.f32.gmra.mrb[0].mxu0 %v998
    %v1066 = vpop.f32.mrb[0].mxu0
    %v1067 = vadd.f32 0.0, %v1066
    %v1068 = vpop.f32.mrb[0].mxu0
    %1069 = vdwg.mxu0
    %1070 = vrot.lane.b32.xlu0 %v137, 48
    %v1071 = vpop.permute.xlu0 %1070
    %v1074 = vsel %vm145, %v993, 0
    %1076 = vmatprep.subr.mxu0 0.0
    %1077 = vmatpush1.msra.mxu0 %v1071
    %1078 = vmatprep.subr.mxu0 0.0
    %1079 = vmatpush1.msra.mxu0 0.0
    %1080 = vmatprep.subr.mxu0 0.0
    %1081 = vmatpush1.msra.mxu0 0.0
    %1082 = vmatprep.subr.mxu0 0.0
    %1083 = vmatpush1.msra.mxu0 0.0
    %1084 = vmatprep.subr.mxu0 0.0
    %1085 = vmatpush1.msra.mxu0 0.0
    %1086 = vmatprep.subr.mxu0 0.0
    %1087 = vmatpush1.msra.mxu0 0.0
    %1088 = vmatprep.subr.mxu0 0.0
    %1089 = vmatpush1.msra.mxu0 0.0
    %1090 = vmatprep.subr.mxu0 0.0
    %1091 = vmatpush1.msra.mxu0 0.0
    %1092 = vmatprep.subr.mxu0 0.0
    %1093 = vmatpush1.msra.mxu0 0.0
    %1094 = vmatprep.subr.mxu0 0.0
    %1095 = vmatpush1.msra.mxu0 0.0
    %1096 = vmatprep.subr.mxu0 0.0
    %1097 = vmatpush1.msra.mxu0 0.0
    %1098 = vmatprep.subr.mxu0 0.0
    %1099 = vmatpush1.msra.mxu0 0.0
    %1100 = vmatprep.subr.mxu0 0.0
    %1101 = vmatpush1.msra.mxu0 0.0
    %1102 = vmatprep.subr.mxu0 0.0
    %1103 = vmatpush1.msra.mxu0 0.0
    %1104 = vmatprep.subr.mxu0 0.0
    %1105 = vmatpush1.msra.mxu0 0.0
    %1106 = vmatprep.subr.mxu0 0.0
    %1107 = vmatpush1.msra.mxu0 0.0
    %1108 = vmatprep.subr.mxu0 0.0
    %1109 = vmatpush1.msra.mxu0 0.0
    %1110 = vmatprep.subr.mxu0 0.0
    %1111 = vmatpush1.msra.mxu0 0.0
    %1112 = vmatprep.subr.mxu0 0.0
    %1113 = vmatpush1.msra.mxu0 0.0
    %1114 = vmatprep.subr.mxu0 0.0
    %1115 = vmatpush1.msra.mxu0 0.0
    %1116 = vmatprep.subr.mxu0 0.0
    %1117 = vmatpush1.msra.mxu0 0.0
    %1118 = vmatprep.subr.mxu0 0.0
    %1119 = vmatpush1.msra.mxu0 0.0
    %1120 = vmatprep.subr.mxu0 0.0
    %1121 = vmatpush1.msra.mxu0 0.0
    %1122 = vmatprep.subr.mxu0 0.0
    %1123 = vmatpush1.msra.mxu0 0.0
    %1124 = vmatprep.subr.mxu0 0.0
    %1125 = vmatpush1.msra.mxu0 0.0
    %1126 = vmatprep.subr.mxu0 0.0
    %1127 = vmatpush1.msra.mxu0 0.0
    %1128 = vmatprep.subr.mxu0 0.0
    %1129 = vmatpush1.msra.mxu0 0.0
    %1130 = vmatprep.subr.mxu0 0.0
    %1131 = vmatpush1.msra.mxu0 0.0
    %1132 = vmatprep.subr.mxu0 0.0
    %1133 = vmatpush1.msra.mxu0 0.0
    %1134 = vmatprep.subr.mxu0 0.0
    %1135 = vmatpush1.msra.mxu0 0.0
    %1136 = vmatprep.subr.mxu0 0.0
    %1137 = vmatpush1.msra.mxu0 0.0
    %1138 = vmatprep.subr.mxu0 0.0
    %1139 = vmatpush1.msra.mxu0 0.0
    %1140 = vmatprep.mubr.f32.mxu0 0.0
    %1141 = vmatmul.mubr.f32.gmra.mrb[0].mxu0 %v1074
    %v1142 = vpop.f32.mrb[0].mxu0
    %v1143 = vadd.f32 0.0, %v1142
    %v1144 = vpop.f32.mrb[0].mxu0
    %1145 = vdwg.mxu0
    %1148 = vrot.lane.b32.xlu0 %v1067, 16
    %v1149 = vpop.permute.xlu0 %1148
    %1150 = vrot.lane.b32.xlu0 %v1143, 16
    %v1151 = vpop.permute.xlu0 %1150
    %vm1154 = vcmask 195712
    %1155 = vst.msk [vmem:[#allocation2] sm:$0xff] %vm1154, %v1149
    %1156 = vst.msk [vmem:[#allocation2 + $0x8] sm:$0xff] %vm1154, %v1151
    %1157 = vrot.lane.b32.xlu0 %v140, 104
    %v1158 = vpop.permute.xlu0 %1157
    %1159 = vrot.lane.b32.xlu0 %v132, 72
    %v1160 = vpop.permute.xlu0 %1159
    %v1161 = vsel %vm145, %v1158, 0
    %v1163 = vsel %vm145, %v1160, 0
    %1165 = vmatprep.subr.mxu0 0.0
    %1166 = vmatpush1.xpose.msra.mxu0 %v1163
    %1167 = vmatprep.subr.mxu0 0.0
    %1168 = vmatpush1.xpose.msra.mxu0 0.0
    %1169 = vmatprep.subr.mxu0 0.0
    %1170 = vmatpush1.xpose.msra.mxu0 0.0
    %1171 = vmatprep.subr.mxu0 0.0
    %1172 = vmatpush1.xpose.msra.mxu0 0.0
    %1173 = vmatprep.subr.mxu0 0.0
    %1174 = vmatpush1.xpose.msra.mxu0 0.0
    %1175 = vmatprep.subr.mxu0 0.0
    %1176 = vmatpush1.xpose.msra.mxu0 0.0
    %1177 = vmatprep.subr.mxu0 0.0
    %1178 = vmatpush1.xpose.msra.mxu0 0.0
    %1179 = vmatprep.subr.mxu0 0.0
    %1180 = vmatpush1.xpose.msra.mxu0 0.0
    %1181 = vmatprep.subr.mxu0 0.0
    %1182 = vmatpush1.xpose.msra.mxu0 0.0
    %1183 = vmatprep.subr.mxu0 0.0
    %1184 = vmatpush1.xpose.msra.mxu0 0.0
    %1185 = vmatprep.subr.mxu0 0.0
    %1186 = vmatpush1.xpose.msra.mxu0 0.0
    %1187 = vmatprep.subr.mxu0 0.0
    %1188 = vmatpush1.xpose.msra.mxu0 0.0
    %1189 = vmatprep.subr.mxu0 0.0
    %1190 = vmatpush1.xpose.msra.mxu0 0.0
    %1191 = vmatprep.subr.mxu0 0.0
    %1192 = vmatpush1.xpose.msra.mxu0 0.0
    %1193 = vmatprep.subr.mxu0 0.0
    %1194 = vmatpush1.xpose.msra.mxu0 0.0
    %1195 = vmatprep.subr.mxu0 0.0
    %1196 = vmatpush1.xpose.msra.mxu0 0.0
    %1197 = vmatprep.subr.mxu0 0.0
    %1198 = vmatpush1.xpose.msra.mxu0 0.0
    %1199 = vmatprep.subr.mxu0 0.0
    %1200 = vmatpush1.xpose.msra.mxu0 0.0
    %1201 = vmatprep.subr.mxu0 0.0
    %1202 = vmatpush1.xpose.msra.mxu0 0.0
    %1203 = vmatprep.subr.mxu0 0.0
    %1204 = vmatpush1.xpose.msra.mxu0 0.0
    %1205 = vmatprep.subr.mxu0 0.0
    %1206 = vmatpush1.xpose.msra.mxu0 0.0
    %1207 = vmatprep.subr.mxu0 0.0
    %1208 = vmatpush1.xpose.msra.mxu0 0.0
    %1209 = vmatprep.subr.mxu0 0.0
    %1210 = vmatpush1.xpose.msra.mxu0 0.0
    %1211 = vmatprep.subr.mxu0 0.0
    %1212 = vmatpush1.xpose.msra.mxu0 0.0
    %1213 = vmatprep.subr.mxu0 0.0
    %1214 = vmatpush1.xpose.msra.mxu0 0.0
    %1215 = vmatprep.subr.mxu0 0.0
    %1216 = vmatpush1.xpose.msra.mxu0 0.0
    %1217 = vmatprep.subr.mxu0 0.0
    %1218 = vmatpush1.xpose.msra.mxu0 0.0
    %1219 = vmatprep.subr.mxu0 0.0
    %1220 = vmatpush1.xpose.msra.mxu0 0.0
    %1221 = vmatprep.subr.mxu0 0.0
    %1222 = vmatpush1.xpose.msra.mxu0 0.0
    %1223 = vmatprep.subr.mxu0 0.0
    %1224 = vmatpush1.xpose.msra.mxu0 0.0
    %1225 = vmatprep.subr.mxu0 0.0
    %1226 = vmatpush1.xpose.msra.mxu0 0.0
    %1227 = vmatprep.subr.mxu0 0.0
    %1228 = vmatpush1.xpose.msra.mxu0 0.0
    %1229 = vmatprep.mubr.f32.mxu0 0.0
    %1230 = vmatmul.mubr.f32.gmra.mrb[0].mxu0 %v1161
    %v1231 = vpop.f32.mrb[0].mxu0
    %v1232 = vadd.f32 0.0, %v1231
    %v1233 = vpop.f32.mrb[0].mxu0
    %1234 = vdwg.mxu0
    %1235 = vrot.lane.b32.xlu0 %v141, 104
    %v1236 = vpop.permute.xlu0 %1235
    %1237 = vrot.lane.b32.xlu0 %v137, 72
    %v1238 = vpop.permute.xlu0 %1237
    %v1239 = vsel %vm145, %v1236, 0
    %v1241 = vsel %vm145, %v1238, 0
    %1243 = vmatprep.subr.mxu0 0.0
    %1244 = vmatpush1.xpose.msra.mxu0 %v1241
    %1245 = vmatprep.subr.mxu0 0.0
    %1246 = vmatpush1.xpose.msra.mxu0 0.0
    %1247 = vmatprep.subr.mxu0 0.0
    %1248 = vmatpush1.xpose.msra.mxu0 0.0
    %1249 = vmatprep.subr.mxu0 0.0
    %1250 = vmatpush1.xpose.msra.mxu0 0.0
    %1251 = vmatprep.subr.mxu0 0.0
    %1252 = vmatpush1.xpose.msra.mxu0 0.0
    %1253 = vmatprep.subr.mxu0 0.0
    %1254 = vmatpush1.xpose.msra.mxu0 0.0
    %1255 = vmatprep.subr.mxu0 0.0
    %1256 = vmatpush1.xpose.msra.mxu0 0.0
    %1257 = vmatprep.subr.mxu0 0.0
    %1258 = vmatpush1.xpose.msra.mxu0 0.0
    %1259 = vmatprep.subr.mxu0 0.0
    %1260 = vmatpush1.xpose.msra.mxu0 0.0
    %1261 = vmatprep.subr.mxu0 0.0
    %1262 = vmatpush1.xpose.msra.mxu0 0.0
    %1263 = vmatprep.subr.mxu0 0.0
    %1264 = vmatpush1.xpose.msra.mxu0 0.0
    %1265 = vmatprep.subr.mxu0 0.0
    %1266 = vmatpush1.xpose.msra.mxu0 0.0
    %1267 = vmatprep.subr.mxu0 0.0
    %1268 = vmatpush1.xpose.msra.mxu0 0.0
    %1269 = vmatprep.subr.mxu0 0.0
    %1270 = vmatpush1.xpose.msra.mxu0 0.0
    %1271 = vmatprep.subr.mxu0 0.0
    %1272 = vmatpush1.xpose.msra.mxu0 0.0
    %1273 = vmatprep.subr.mxu0 0.0
    %1274 = vmatpush1.xpose.msra.mxu0 0.0
    %1275 = vmatprep.subr.mxu0 0.0
    %1276 = vmatpush1.xpose.msra.mxu0 0.0
    %1277 = vmatprep.subr.mxu0 0.0
    %1278 = vmatpush1.xpose.msra.mxu0 0.0
    %1279 = vmatprep.subr.mxu0 0.0
    %1280 = vmatpush1.xpose.msra.mxu0 0.0
    %1281 = vmatprep.subr.mxu0 0.0
    %1282 = vmatpush1.xpose.msra.mxu0 0.0
    %1283 = vmatprep.subr.mxu0 0.0
    %1284 = vmatpush1.xpose.msra.mxu0 0.0
    %1285 = vmatprep.subr.mxu0 0.0
    %1286 = vmatpush1.xpose.msra.mxu0 0.0
    %1287 = vmatprep.subr.mxu0 0.0
    %1288 = vmatpush1.xpose.msra.mxu0 0.0
    %1289 = vmatprep.subr.mxu0 0.0
    %1290 = vmatpush1.xpose.msra.mxu0 0.0
    %1291 = vmatprep.subr.mxu0 0.0
    %1292 = vmatpush1.xpose.msra.mxu0 0.0
    %1293 = vmatprep.subr.mxu0 0.0
    %1294 = vmatpush1.xpose.msra.mxu0 0.0
    %1295 = vmatprep.subr.mxu0 0.0
    %1296 = vmatpush1.xpose.msra.mxu0 0.0
    %1297 = vmatprep.subr.mxu0 0.0
    %1298 = vmatpush1.xpose.msra.mxu0 0.0
    %1299 = vmatprep.subr.mxu0 0.0
    %1300 = vmatpush1.xpose.msra.mxu0 0.0
    %1301 = vmatprep.subr.mxu0 0.0
    %1302 = vmatpush1.xpose.msra.mxu0 0.0
    %1303 = vmatprep.subr.mxu0 0.0
    %1304 = vmatpush1.xpose.msra.mxu0 0.0
    %1305 = vmatprep.subr.mxu0 0.0
    %1306 = vmatpush1.xpose.msra.mxu0 0.0
    %1307 = vmatprep.mubr.f32.mxu0 0.0
    %1308 = vmatmul.mubr.f32.gmra.mrb[0].mxu0 %v1239
    %v1309 = vpop.f32.mrb[0].mxu0
    %v1310 = vadd.f32 0.0, %v1309
    %v1311 = vpop.f32.mrb[0].mxu0
    %1312 = vdwg.mxu0
    %v1313 = vsel %vm145, %v1232, -inf
    %1314 = vmax.xlane.f32.xlu0 %v1313
    %v1315 = vpop.xlane.xlu0 %1314
    %v1316 = vsel %vm145, %v1310, -inf
    %1317 = vmax.xlane.f32.xlu0 %v1316
    %v1318 = vpop.xlane.xlu0 %1317
    %v1319 = vsub.f32 %v1232, %v1315
    %v1320 = vsub.f32 %v1310, %v1318
    %v1321 = vmul.f32 %v1319, 1.442695
    %v1322 = vpow.pop %v1321
    %v1323 = vmul.f32 %v1320, 1.442695
    %v1324 = vpow.pop %v1323
    %v1325 = vsel %vm145, %v1322, 0.0
    %1326 = vadd.xlane.f32.xlu0 %v1325
    %v1327 = vpop.xlane.xlu0 %1326
    %v1328 = vsel %vm145, %v1324, 0.0
    %1329 = vadd.xlane.f32.xlu0 %v1328
    %v1330 = vpop.xlane.xlu0 %1329
    %v1331 = vrcp.pop %v1327
    %v1332 = vrcp.pop %v1330
    %v1333 = vmul.f32 %v1322, %v1331
    %v1334 = vmul.f32 %v1324, %v1332
    %1335 = vrot.lane.b32.xlu0 %v132, 40
    %v1336 = vpop.permute.xlu0 %1335
    %v1339 = vsel %vm145, %v1333, 0
    %1341 = vmatprep.subr.mxu0 0.0
    %1342 = vmatpush1.msra.mxu0 %v1336
    %1343 = vmatprep.subr.mxu0 0.0
    %1344 = vmatpush1.msra.mxu0 0.0
    %1345 = vmatprep.subr.mxu0 0.0
    %1346 = vmatpush1.msra.mxu0 0.0
    %1347 = vmatprep.subr.mxu0 0.0
    %1348 = vmatpush1.msra.mxu0 0.0
    %1349 = vmatprep.subr.mxu0 0.0
    %1350 = vmatpush1.msra.mxu0 0.0
    %1351 = vmatprep.subr.mxu0 0.0
    %1352 = vmatpush1.msra.mxu0 0.0
    %1353 = vmatprep.subr.mxu0 0.0
    %1354 = vmatpush1.msra.mxu0 0.0
    %1355 = vmatprep.subr.mxu0 0.0
    %1356 = vmatpush1.msra.mxu0 0.0
    %1357 = vmatprep.subr.mxu0 0.0
    %1358 = vmatpush1.msra.mxu0 0.0
    %1359 = vmatprep.subr.mxu0 0.0
    %1360 = vmatpush1.msra.mxu0 0.0
    %1361 = vmatprep.subr.mxu0 0.0
    %1362 = vmatpush1.msra.mxu0 0.0
    %1363 = vmatprep.subr.mxu0 0.0
    %1364 = vmatpush1.msra.mxu0 0.0
    %1365 = vmatprep.subr.mxu0 0.0
    %1366 = vmatpush1.msra.mxu0 0.0
    %1367 = vmatprep.subr.mxu0 0.0
    %1368 = vmatpush1.msra.mxu0 0.0
    %1369 = vmatprep.subr.mxu0 0.0
    %1370 = vmatpush1.msra.mxu0 0.0
    %1371 = vmatprep.subr.mxu0 0.0
    %1372 = vmatpush1.msra.mxu0 0.0
    %1373 = vmatprep.subr.mxu0 0.0
    %1374 = vmatpush1.msra.mxu0 0.0
    %1375 = vmatprep.subr.mxu0 0.0
    %1376 = vmatpush1.msra.mxu0 0.0
    %1377 = vmatprep.subr.mxu0 0.0
    %1378 = vmatpush1.msra.mxu0 0.0
    %1379 = vmatprep.subr.mxu0 0.0
    %1380 = vmatpush1.msra.mxu0 0.0
    %1381 = vmatprep.subr.mxu0 0.0
    %1382 = vmatpush1.msra.mxu0 0.0
    %1383 = vmatprep.subr.mxu0 0.0
    %1384 = vmatpush1.msra.mxu0 0.0
    %1385 = vmatprep.subr.mxu0 0.0
    %1386 = vmatpush1.msra.mxu0 0.0
    %1387 = vmatprep.subr.mxu0 0.0
    %1388 = vmatpush1.msra.mxu0 0.0
    %1389 = vmatprep.subr.mxu0 0.0
    %1390 = vmatpush1.msra.mxu0 0.0
    %1391 = vmatprep.subr.mxu0 0.0
    %1392 = vmatpush1.msra.mxu0 0.0
    %1393 = vmatprep.subr.mxu0 0.0
    %1394 = vmatpush1.msra.mxu0 0.0
    %1395 = vmatprep.subr.mxu0 0.0
    %1396 = vmatpush1.msra.mxu0 0.0
    %1397 = vmatprep.subr.mxu0 0.0
    %1398 = vmatpush1.msra.mxu0 0.0
    %1399 = vmatprep.subr.mxu0 0.0
    %1400 = vmatpush1.msra.mxu0 0.0
    %1401 = vmatprep.subr.mxu0 0.0
    %1402 = vmatpush1.msra.mxu0 0.0
    %1403 = vmatprep.subr.mxu0 0.0
    %1404 = vmatpush1.msra.mxu0 0.0
    %1405 = vmatprep.mubr.f32.mxu0 0.0
    %1406 = vmatmul.mubr.f32.gmra.mrb[0].mxu0 %v1339
    %v1407 = vpop.f32.mrb[0].mxu0
    %v1408 = vadd.f32 0.0, %v1407
    %v1409 = vpop.f32.mrb[0].mxu0
    %1410 = vdwg.mxu0
    %1411 = vrot.lane.b32.xlu0 %v137, 40
    %v1412 = vpop.permute.xlu0 %1411
    %v1415 = vsel %vm145, %v1334, 0
    %1417 = vmatprep.subr.mxu0 0.0
    %1418 = vmatpush1.msra.mxu0 %v1412
    %1419 = vmatprep.subr.mxu0 0.0
    %1420 = vmatpush1.msra.mxu0 0.0
    %1421 = vmatprep.subr.mxu0 0.0
    %1422 = vmatpush1.msra.mxu0 0.0
    %1423 = vmatprep.subr.mxu0 0.0
    %1424 = vmatpush1.msra.mxu0 0.0
    %1425 = vmatprep.subr.mxu0 0.0
    %1426 = vmatpush1.msra.mxu0 0.0
    %1427 = vmatprep.subr.mxu0 0.0
    %1428 = vmatpush1.msra.mxu0 0.0
    %1429 = vmatprep.subr.mxu0 0.0
    %1430 = vmatpush1.msra.mxu0 0.0
    %1431 = vmatprep.subr.mxu0 0.0
    %1432 = vmatpush1.msra.mxu0 0.0
    %1433 = vmatprep.subr.mxu0 0.0
    %1434 = vmatpush1.msra.mxu0 0.0
    %1435 = vmatprep.subr.mxu0 0.0
    %1436 = vmatpush1.msra.mxu0 0.0
    %1437 = vmatprep.subr.mxu0 0.0
    %1438 = vmatpush1.msra.mxu0 0.0
    %1439 = vmatprep.subr.mxu0 0.0
    %1440 = vmatpush1.msra.mxu0 0.0
    %1441 = vmatprep.subr.mxu0 0.0
    %1442 = vmatpush1.msra.mxu0 0.0
    %1443 = vmatprep.subr.mxu0 0.0
    %1444 = vmatpush1.msra.mxu0 0.0
    %1445 = vmatprep.subr.mxu0 0.0
    %1446 = vmatpush1.msra.mxu0 0.0
    %1447 = vmatprep.subr.mxu0 0.0
    %1448 = vmatpush1.msra.mxu0 0.0
    %1449 = vmatprep.subr.mxu0 0.0
    %1450 = vmatpush1.msra.mxu0 0.0
    %1451 = vmatprep.subr.mxu0 0.0
    %1452 = vmatpush1.msra.mxu0 0.0
    %1453 = vmatprep.subr.mxu0 0.0
    %1454 = vmatpush1.msra.mxu0 0.0
    %1455 = vmatprep.subr.mxu0 0.0
    %1456 = vmatpush1.msra.mxu0 0.0
    %1457 = vmatprep.subr.mxu0 0.0
    %1458 = vmatpush1.msra.mxu0 0.0
    %1459 = vmatprep.subr.mxu0 0.0
    %1460 = vmatpush1.msra.mxu0 0.0
    %1461 = vmatprep.subr.mxu0 0.0
    %1462 = vmatpush1.msra.mxu0 0.0
    %1463 = vmatprep.subr.mxu0 0.0
    %1464 = vmatpush1.msra.mxu0 0.0
    %1465 = vmatprep.subr.mxu0 0.0
    %1466 = vmatpush1.msra.mxu0 0.0
    %1467 = vmatprep.subr.mxu0 0.0
    %1468 = vmatpush1.msra.mxu0 0.0
    %1469 = vmatprep.subr.mxu0 0.0
    %1470 = vmatpush1.msra.mxu0 0.0
    %1471 = vmatprep.subr.mxu0 0.0
    %1472 = vmatpush1.msra.mxu0 0.0
    %1473 = vmatprep.subr.mxu0 0.0
    %1474 = vmatpush1.msra.mxu0 0.0
    %1475 = vmatprep.subr.mxu0 0.0
    %1476 = vmatpush1.msra.mxu0 0.0
    %1477 = vmatprep.subr.mxu0 0.0
    %1478 = vmatpush1.msra.mxu0 0.0
    %1479 = vmatprep.subr.mxu0 0.0
    %1480 = vmatpush1.msra.mxu0 0.0
    %1481 = vmatprep.mubr.f32.mxu0 0.0
    %1482 = vmatmul.mubr.f32.gmra.mrb[0].mxu0 %v1415
    %v1483 = vpop.f32.mrb[0].mxu0
    %v1484 = vadd.f32 0.0, %v1483
    %v1485 = vpop.f32.mrb[0].mxu0
    %1486 = vdwg.mxu0
    %1489 = vrot.lane.b32.xlu0 %v1408, 24
    %v1490 = vpop.permute.xlu0 %1489
    %1491 = vrot.lane.b32.xlu0 %v1484, 24
    %v1492 = vpop.permute.xlu0 %1491
    %vm1495 = vcmask 261312
    %1496 = vst.msk [vmem:[#allocation2] sm:$0xff] %vm1495, %v1490
    %1497 = vst.msk [vmem:[#allocation2 + $0x8] sm:$0xff] %vm1495, %v1492
    %v1498 = vld [vmem:[#allocation2] sm:$0xff]
    %v1499 = vld [vmem:[#allocation2 + $0x8] sm:$0xff]
    %v1500 = vld [vmem:[%s3] sm:$0xff]
    %v1501 = vld [vmem:[%s3 + $0x8] sm:$0xff]
    %v1502 = vld [vmem:[%s3 + $0x10] sm:$0xff]
    %v1503 = vld [vmem:[%s3 + $0x18] sm:$0xff]
    %v1504 = vld [vmem:[%s4] sm:$0x1]
    %v1506 = vlaneseq
    %v1507 = vshrl.u32 %v1506, 7
    %v1508 = vsub.s32 0, %v1507
    %v1509 = vrot.slane %v1504, %v1508
    %v1512 = vsel %vm58, %v1498, 0
    %v1515 = vsel %vm58, %v1499, 0
    %1517 = vmatprep.subr.mxu0 0.0
    %1518 = vmatpush1.msra.mxu0 %v1500
    %1519 = vmatprep.subr.mxu0 0.0
    %1520 = vmatpush1.msra.mxu0 %v1501
    %1521 = vmatprep.subr.mxu0 0.0
    %1522 = vmatpush1.msra.mxu0 %v1502
    %1523 = vmatprep.subr.mxu0 0.0
    %1524 = vmatpush1.msra.mxu0 %v1503
    %1525 = vmatprep.subr.mxu0 0.0
    %1526 = vmatpush1.msra.mxu0 0.0
    %1527 = vmatprep.subr.mxu0 0.0
    %1528 = vmatpush1.msra.mxu0 0.0
    %1529 = vmatprep.subr.mxu0 0.0
    %1530 = vmatpush1.msra.mxu0 0.0
    %1531 = vmatprep.subr.mxu0 0.0
    %1532 = vmatpush1.msra.mxu0 0.0
    %1533 = vmatprep.subr.mxu0 0.0
    %1534 = vmatpush1.msra.mxu0 0.0
    %1535 = vmatprep.subr.mxu0 0.0
    %1536 = vmatpush1.msra.mxu0 0.0
    %1537 = vmatprep.subr.mxu0 0.0
    %1538 = vmatpush1.msra.mxu0 0.0
    %1539 = vmatprep.subr.mxu0 0.0
    %1540 = vmatpush1.msra.mxu0 0.0
    %1541 = vmatprep.subr.mxu0 0.0
    %1542 = vmatpush1.msra.mxu0 0.0
    %1543 = vmatprep.subr.mxu0 0.0
    %1544 = vmatpush1.msra.mxu0 0.0
    %1545 = vmatprep.subr.mxu0 0.0
    %1546 = vmatpush1.msra.mxu0 0.0
    %1547 = vmatprep.subr.mxu0 0.0
    %1548 = vmatpush1.msra.mxu0 0.0
    %1549 = vmatprep.subr.mxu0 0.0
    %1550 = vmatpush1.msra.mxu0 0.0
    %1551 = vmatprep.subr.mxu0 0.0
    %1552 = vmatpush1.msra.mxu0 0.0
    %1553 = vmatprep.subr.mxu0 0.0
    %1554 = vmatpush1.msra.mxu0 0.0
    %1555 = vmatprep.subr.mxu0 0.0
    %1556 = vmatpush1.msra.mxu0 0.0
    %1557 = vmatprep.subr.mxu0 0.0
    %1558 = vmatpush1.msra.mxu0 0.0
    %1559 = vmatprep.subr.mxu0 0.0
    %1560 = vmatpush1.msra.mxu0 0.0
    %1561 = vmatprep.subr.mxu0 0.0
    %1562 = vmatpush1.msra.mxu0 0.0
    %1563 = vmatprep.subr.mxu0 0.0
    %1564 = vmatpush1.msra.mxu0 0.0
    %1565 = vmatprep.subr.mxu0 0.0
    %1566 = vmatpush1.msra.mxu0 0.0
    %1567 = vmatprep.subr.mxu0 0.0
    %1568 = vmatpush1.msra.mxu0 0.0
    %1569 = vmatprep.subr.mxu0 0.0
    %1570 = vmatpush1.msra.mxu0 0.0
    %1571 = vmatprep.subr.mxu0 0.0
    %1572 = vmatpush1.msra.mxu0 0.0
    %1573 = vmatprep.subr.mxu0 0.0
    %1574 = vmatpush1.msra.mxu0 0.0
    %1575 = vmatprep.subr.mxu0 0.0
    %1576 = vmatpush1.msra.mxu0 0.0
    %1577 = vmatprep.subr.mxu0 0.0
    %1578 = vmatpush1.msra.mxu0 0.0
    %1579 = vmatprep.subr.mxu0 0.0
    %1580 = vmatpush1.msra.mxu0 0.0
    %1581 = vmatprep.mubr.f32.mxu0 0.0
    %1582 = vmatmul.mubr.f32.gmra.mrb[0].mxu0 %v1512
    %v1583 = vpop.f32.mrb[0].mxu0
    %v1584 = vadd.f32 %v1509, %v1583
    %v1585 = vpop.f32.mrb[0].mxu0
    %1586 = vmatprep.mubr.f32.mxu0 0.0
    %1587 = vmatmul.mubr.f32.gmra.mrb[0].mxu0 %v1515
    %v1588 = vpop.f32.mrb[0].mxu0
    %v1589 = vadd.f32 %v1509, %v1588
    %v1590 = vpop.f32.mrb[0].mxu0
    %1591 = vdwg.mxu0
    %v1592 = vadd.f32 %v45, %v1584
    %v1593 = vadd.f32 %v46, %v1589
    %v1594 = vsel %vm58, %v1592, 0.0
    %1595 = vadd.xlane.f32.xlu0 %v1594
    %v1596 = vpop.xlane.xlu0 %1595
    %v1597 = vsel %vm58, %v1593, 0.0
    %1598 = vadd.xlane.f32.xlu0 %v1597
    %v1599 = vpop.xlane.xlu0 %1598
    %v1600 = vrcp.pop 32.0
    %v1601 = vmul.f32 %v1596, %v1600
    %v1602 = vmul.f32 %v1599, %v1600
    %v1603 = vsub.f32 %v1592, %v1601
    %v1604 = vsub.f32 %v1593, %v1602
    %v1605 = vmul.f32 %v1603, %v1603
    %v1606 = vmul.f32 %v1604, %v1604
    %v1607 = vsel %vm58, %v1605, 0.0
    %1608 = vadd.xlane.f32.xlu0 %v1607
    %v1609 = vpop.xlane.xlu0 %1608
    %v1610 = vsel %vm58, %v1606, 0.0
    %1611 = vadd.xlane.f32.xlu0 %v1610
    %v1612 = vpop.xlane.xlu0 %1611
    %v1613 = vmul.f32 %v1609, %v1600
    %v1614 = vmul.f32 %v1612, %v1600
    %v1615 = vadd.f32 %v1613, 1e-05
    %v1616 = vadd.f32 %v1614, 1e-05
    %v1617 = vrsqrt.pop %v1615
    %v1618 = vrsqrt.pop %v1616
    %v1619 = vmul.f32 %v1603, %v1617
    %v1620 = vmul.f32 %v1604, %v1618
    %v1621 = vld [vmem:[%s9] sm:$0x1]
    %v1623 = vlaneseq
    %v1624 = vshrl.u32 %v1623, 7
    %v1625 = vsub.s32 0, %v1624
    %v1626 = vrot.slane %v1621, %v1625
    %v1628 = vmul.f32 %v1619, %v1626
    %v1629 = vmul.f32 %v1620, %v1626
    %v1630 = vld [vmem:[%s10] sm:$0x1]
    %v1632 = vlaneseq
    %v1633 = vshrl.u32 %v1632, 7
    %v1634 = vsub.s32 0, %v1633
    %v1635 = vrot.slane %v1630, %v1634
    %v1637 = vadd.f32 %v1628, %v1635
    %v1638 = vadd.f32 %v1629, %v1635
    %v1639 = vld [vmem:[%s5] sm:$0xff]
    %v1640 = vld [vmem:[%s5 + $0x8] sm:$0xff]
    %v1641 = vld [vmem:[%s5 + $0x10] sm:$0xff]
    %v1642 = vld [vmem:[%s5 + $0x18] sm:$0xff]
    %v1643 = vld [vmem:[%s5 + $0x20] sm:$0xff]
    %v1644 = vld [vmem:[%s5 + $0x28] sm:$0xff]
    %v1645 = vld [vmem:[%s5 + $0x30] sm:$0xff]
    %v1646 = vld [vmem:[%s5 + $0x38] sm:$0xff]
    %v1647 = vld [vmem:[%s5 + $0x40] sm:$0xff]
    %v1648 = vld [vmem:[%s5 + $0x48] sm:$0xff]
    %v1649 = vld [vmem:[%s5 + $0x50] sm:$0xff]
    %v1650 = vld [vmem:[%s5 + $0x58] sm:$0xff]
    %v1651 = vld [vmem:[%s5 + $0x60] sm:$0xff]
    %v1652 = vld [vmem:[%s5 + $0x68] sm:$0xff]
    %v1653 = vld [vmem:[%s5 + $0x70] sm:$0xff]
    %v1654 = vld [vmem:[%s5 + $0x78] sm:$0xff]
    %v1655 = vld [vmem:[%s6] sm:$0xf]
    %v1657 = vlaneseq
    %v1658 = vshrl.u32 %v1657, 7
    %v1659 = vsub.s32 0, %v1658
    %v1660 = vrot.slane %v1655, %v1659
    %v1661 = vlaneseq
    %v1662 = vshrl.u32 %v1661, 7
    %v1663 = vsub.s32 1, %v1662
    %v1664 = vrot.slane %v1655, %v1663
    %v1665 = vlaneseq
    %v1666 = vshrl.u32 %v1665, 7
    %v1667 = vsub.s32 2, %v1666
    %v1668 = vrot.slane %v1655, %v1667
    %v1669 = vlaneseq
    %v1670 = vshrl.u32 %v1669, 7
    %v1671 = vsub.s32 3, %v1670
    %v1672 = vrot.slane %v1655, %v1671
    %v1678 = vsel %vm58, %v1637, 0
    %v1681 = vsel %vm58, %v1638, 0
    %1683 = vmatprep.subr.mxu0 %v1640
    %1684 = vmatpush1.msra.mxu0 %v1639
    %1685 = vmatprep.subr.mxu0 %v1644
    %1686 = vmatpush1.msra.mxu0 %v1643
    %1687 = vmatprep.subr.mxu0 %v1648
    %1688 = vmatpush1.msra.mxu0 %v1647
    %1689 = vmatprep.subr.mxu0 %v1652
    %1690 = vmatpush1.msra.mxu0 %v1651
    %1691 = vmatprep.subr.mxu0 0.0
    %1692 = vmatpush1.msra.mxu0 0.0
    %1693 = vmatprep.subr.mxu0 0.0
    %1694 = vmatpush1.msra.mxu0 0.0
    %1695 = vmatprep.subr.mxu0 0.0
    %1696 = vmatpush1.msra.mxu0 0.0
    %1697 = vmatprep.subr.mxu0 0.0
    %1698 = vmatpush1.msra.mxu0 0.0
    %1699 = vmatprep.subr.mxu0 0.0
    %1700 = vmatpush1.msra.mxu0 0.0
    %1701 = vmatprep.subr.mxu0 0.0
    %1702 = vmatpush1.msra.mxu0 0.0
    %1703 = vmatprep.subr.mxu0 0.0
    %1704 = vmatpush1.msra.mxu0 0.0
    %1705 = vmatprep.subr.mxu0 0.0
    %1706 = vmatpush1.msra.mxu0 0.0
    %1707 = vmatprep.subr.mxu0 0.0
    %1708 = vmatpush1.msra.mxu0 0.0
    %1709 = vmatprep.subr.mxu0 0.0
    %1710 = vmatpush1.msra.mxu0 0.0
    %1711 = vmatprep.subr.mxu0 0.0
    %1712 = vmatpush1.msra.mxu0 0.0
    %1713 = vmatprep.subr.mxu0 0.0
    %1714 = vmatpush1.msra.mxu0 0.0
    %1715 = vmatprep.subr.mxu0 0.0
    %1716 = vmatpush1.msra.mxu0 0.0
    %1717 = vmatprep.subr.mxu0 0.0
    %1718 = vmatpush1.msra.mxu0 0.0
    %1719 = vmatprep.subr.mxu0 0.0
    %1720 = vmatpush1.msra.mxu0 0.0
    %1721 = vmatprep.subr.mxu0 0.0
    %1722 = vmatpush1.msra.mxu0 0.0
    %1723 = vmatprep.subr.mxu0 0.0
    %1724 = vmatpush1.msra.mxu0 0.0
    %1725 = vmatprep.subr.mxu0 0.0
    %1726 = vmatpush1.msra.mxu0 0.0
    %1727 = vmatprep.subr.mxu0 0.0
    %1728 = vmatpush1.msra.mxu0 0.0
    %1729 = vmatprep.subr.mxu0 0.0
    %1730 = vmatpush1.msra.mxu0 0.0
    %1731 = vmatprep.subr.mxu0 0.0
    %1732 = vmatpush1.msra.mxu0 0.0
    %1733 = vmatprep.subr.mxu0 0.0
    %1734 = vmatpush1.msra.mxu0 0.0
    %1735 = vmatprep.subr.mxu0 0.0
    %1736 = vmatpush1.msra.mxu0 0.0
    %1737 = vmatprep.subr.mxu0 0.0
    %1738 = vmatpush1.msra.mxu0 0.0
    %1739 = vmatprep.subr.mxu0 0.0
    %1740 = vmatpush1.msra.mxu0 0.0
    %1741 = vmatprep.subr.mxu0 0.0
    %1742 = vmatpush1.msra.mxu0 0.0
    %1743 = vmatprep.subr.mxu0 0.0
    %1744 = vmatpush1.msra.mxu0 0.0
    %1745 = vmatprep.subr.mxu0 0.0
    %1746 = vmatpush1.msra.mxu0 0.0
    %1747 = vmatprep.mubr.f32.mxu0 0.0
    %1748 = vmatmul.mubr.f32.gmra.mrb[0].mxu0 %v1678
    %v1749 = vpop.f32.mrb[0].mxu0
    %v1750 = vadd.f32 %v1660, %v1749
    %v1751 = vpop.f32.mrb[0].mxu0
    %v1752 = vadd.f32 %v1664, %v1751
    %1753 = vmatprep.mubr.f32.mxu0 0.0
    %1754 = vmatmul.mubr.f32.gmra.mrb[0].mxu0 %v1681
    %v1755 = vpop.f32.mrb[0].mxu0
    %v1756 = vadd.f32 %v1660, %v1755
    %v1757 = vpop.f32.mrb[0].mxu0
    %v1758 = vadd.f32 %v1664, %v1757
    %1759 = vdwg.mxu0
    %1760 = vmatprep.subr.mxu0 %v1642
    %1761 = vmatpush1.msra.mxu0 %v1641
    %1762 = vmatprep.subr.mxu0 %v1646
    %1763 = vmatpush1.msra.mxu0 %v1645
    %1764 = vmatprep.subr.mxu0 %v1650
    %1765 = vmatpush1.msra.mxu0 %v1649
    %1766 = vmatprep.subr.mxu0 %v1654
    %1767 = vmatpush1.msra.mxu0 %v1653
    %1768 = vmatprep.subr.mxu0 0.0
    %1769 = vmatpush1.msra.mxu0 0.0
    %1770 = vmatprep.subr.mxu0 0.0
    %1771 = vmatpush1.msra.mxu0 0.0
    %1772 = vmatprep.subr.mxu0 0.0
    %1773 = vmatpush1.msra.mxu0 0.0
    %1774 = vmatprep.subr.mxu0 0.0
    %1775 = vmatpush1.msra.mxu0 0.0
    %1776 = vmatprep.subr.mxu0 0.0
    %1777 = vmatpush1.msra.mxu0 0.0
    %1778 = vmatprep.subr.mxu0 0.0
    %1779 = vmatpush1.msra.mxu0 0.0
    %1780 = vmatprep.subr.mxu0 0.0
    %1781 = vmatpush1.msra.mxu0 0.0
    %1782 = vmatprep.subr.mxu0 0.0
    %1783 = vmatpush1.msra.mxu0 0.0
    %1784 = vmatprep.subr.mxu0 0.0
    %1785 = vmatpush1.msra.mxu0 0.0
    %1786 = vmatprep.subr.mxu0 0.0
    %1787 = vmatpush1.msra.mxu0 0.0
    %1788 = vmatprep.subr.mxu0 0.0
    %1789 = vmatpush1.msra.mxu0 0.0
    %1790 = vmatprep.subr.mxu0 0.0
    %1791 = vmatpush1.msra.mxu0 0.0
    %1792 = vmatprep.subr.mxu0 0.0
    %1793 = vmatpush1.msra.mxu0 0.0
    %1794 = vmatprep.subr.mxu0 0.0
    %1795 = vmatpush1.msra.mxu0 0.0
    %1796 = vmatprep.subr.mxu0 0.0
    %1797 = vmatpush1.msra.mxu0 0.0
    %1798 = vmatprep.subr.mxu0 0.0
    %1799 = vmatpush1.msra.mxu0 0.0
    %1800 = vmatprep.subr.mxu0 0.0
    %1801 = vmatpush1.msra.mxu0 0.0
    %1802 = vmatprep.subr.mxu0 0.0
    %1803 = vmatpush1.msra.mxu0 0.0
    %1804 = vmatprep.subr.mxu0 0.0
    %1805 = vmatpush1.msra.mxu0 0.0
    %1806 = vmatprep.subr.mxu0 0.0
    %1807 = vmatpush1.msra.mxu0 0.0
    %1808 = vmatprep.subr.mxu0 0.0
    %1809 = vmatpush1.msra.mxu0 0.0
    %1810 = vmatprep.subr.mxu0 0.0
    %1811 = vmatpush1.msra.mxu0 0.0
    %1812 = vmatprep.subr.mxu0 0.0
    %1813 = vmatpush1.msra.mxu0 0.0
    %1814 = vmatprep.subr.mxu0 0.0
    %1815 = vmatpush1.msra.mxu0 0.0
    %1816 = vmatprep.subr.mxu0 0.0
    %1817 = vmatpush1.msra.mxu0 0.0
    %1818 = vmatprep.subr.mxu0 0.0
    %1819 = vmatpush1.msra.mxu0 0.0
    %1820 = vmatprep.subr.mxu0 0.0
    %1821 = vmatpush1.msra.mxu0 0.0
    %1822 = vmatprep.subr.mxu0 0.0
    %1823 = vmatpush1.msra.mxu0 0.0
    %1824 = vmatprep.mubr.f32.mxu0 0.0
    %1825 = vmatmul.mubr.f32.gmra.mrb[0].mxu0 %v1678
    %v1826 = vpop.f32.mrb[0].mxu0
    %v1827 = vadd.f32 %v1668, %v1826
    %v1828 = vpop.f32.mrb[0].mxu0
    %v1829 = vadd.f32 %v1672, %v1828
    %1830 = vmatprep.mubr.f32.mxu0 0.0
    %1831 = vmatmul.mubr.f32.gmra.mrb[0].mxu0 %v1681
    %v1832 = vpop.f32.mrb[0].mxu0
    %v1833 = vadd.f32 %v1668, %v1832
    %v1834 = vpop.f32.mrb[0].mxu0
    %v1835 = vadd.f32 %v1672, %v1834
    %1836 = vdwg.mxu0
    %v1837 = vmax.f32 %v1750, 0.0
    %v1838 = vmax.f32 %v1752, 0.0
    %v1839 = vmax.f32 %v1827, 0.0
    %v1840 = vmax.f32 %v1829, 0.0
    %v1841 = vmax.f32 %v1756, 0.0
    %v1842 = vmax.f32 %v1758, 0.0
    %v1843 = vmax.f32 %v1833, 0.0
    %v1844 = vmax.f32 %v1835, 0.0
    %v1845 = vld [vmem:[%s7] sm:$0xff]
    %v1846 = vld [vmem:[%s7 + $0x8] sm:$0xff]
    %v1847 = vld [vmem:[%s7 + $0x10] sm:$0xff]
    %v1848 = vld [vmem:[%s7 + $0x18] sm:$0xff]
    %v1849 = vld [vmem:[%s7 + $0x20] sm:$0xff]
    %v1850 = vld [vmem:[%s7 + $0x28] sm:$0xff]
    %v1851 = vld [vmem:[%s7 + $0x30] sm:$0xff]
    %v1852 = vld [vmem:[%s7 + $0x38] sm:$0xff]
    %v1853 = vld [vmem:[%s7 + $0x40] sm:$0xff]
    %v1854 = vld [vmem:[%s7 + $0x48] sm:$0xff]
    %v1855 = vld [vmem:[%s7 + $0x50] sm:$0xff]
    %v1856 = vld [vmem:[%s7 + $0x58] sm:$0xff]
    %v1857 = vld [vmem:[%s7 + $0x60] sm:$0xff]
    %v1858 = vld [vmem:[%s7 + $0x68] sm:$0xff]
    %v1859 = vld [vmem:[%s7 + $0x70] sm:$0xff]
    %v1860 = vld [vmem:[%s7 + $0x78] sm:$0xff]
    %v1861 = vld [vmem:[%s7 + $0x80] sm:$0xff]
    %v1862 = vld [vmem:[%s7 + $0x88] sm:$0xff]
    %v1863 = vld [vmem:[%s7 + $0x90] sm:$0xff]
    %v1864 = vld [vmem:[%s7 + $0x98] sm:$0xff]
    %v1865 = vld [vmem:[%s7 + $0xa0] sm:$0xff]
    %v1866 = vld [vmem:[%s7 + $0xa8] sm:$0xff]
    %v1867 = vld [vmem:[%s7 + $0xb0] sm:$0xff]
    %v1868 = vld [vmem:[%s7 + $0xb8] sm:$0xff]
    %v1869 = vld [vmem:[%s7 + $0xc0] sm:$0xff]
    %v1870 = vld [vmem:[%s7 + $0xc8] sm:$0xff]
    %v1871 = vld [vmem:[%s7 + $0xd0] sm:$0xff]
    %v1872 = vld [vmem:[%s7 + $0xd8] sm:$0xff]
    %v1873 = vld [vmem:[%s7 + $0xe0] sm:$0xff]
    %v1874 = vld [vmem:[%s7 + $0xe8] sm:$0xff]
    %v1875 = vld [vmem:[%s7 + $0xf0] sm:$0xff]
    %v1876 = vld [vmem:[%s7 + $0xf8] sm:$0xff]
    %v1877 = vld [vmem:[%s7 + $0x100] sm:$0xff]
    %v1878 = vld [vmem:[%s7 + $0x108] sm:$0xff]
    %v1879 = vld [vmem:[%s7 + $0x110] sm:$0xff]
    %v1880 = vld [vmem:[%s7 + $0x118] sm:$0xff]
    %v1881 = vld [vmem:[%s7 + $0x120] sm:$0xff]
    %v1882 = vld [vmem:[%s7 + $0x128] sm:$0xff]
    %v1883 = vld [vmem:[%s7 + $0x130] sm:$0xff]
    %v1884 = vld [vmem:[%s7 + $0x138] sm:$0xff]
    %v1885 = vld [vmem:[%s7 + $0x140] sm:$0xff]
    %v1886 = vld [vmem:[%s7 + $0x148] sm:$0xff]
    %v1887 = vld [vmem:[%s7 + $0x150] sm:$0xff]
    %v1888 = vld [vmem:[%s7 + $0x158] sm:$0xff]
    %v1889 = vld [vmem:[%s7 + $0x160] sm:$0xff]
    %v1890 = vld [vmem:[%s7 + $0x168] sm:$0xff]
    %v1891 = vld [vmem:[%s7 + $0x170] sm:$0xff]
    %v1892 = vld [vmem:[%s7 + $0x178] sm:$0xff]
    %v1893 = vld [vmem:[%s7 + $0x180] sm:$0xff]
    %v1894 = vld [vmem:[%s7 + $0x188] sm:$0xff]
    %v1895 = vld [vmem:[%s7 + $0x190] sm:$0xff]
    %v1896 = vld [vmem:[%s7 + $0x198] sm:$0xff]
    %v1897 = vld [vmem:[%s7 + $0x1a0] sm:$0xff]
    %v1898 = vld [vmem:[%s7 + $0x1a8] sm:$0xff]
    %v1899 = vld [vmem:[%s7 + $0x1b0] sm:$0xff]
    %v1900 = vld [vmem:[%s7 + $0x1b8] sm:$0xff]
    %v1901 = vld [vmem:[%s7 + $0x1c0] sm:$0xff]
    %v1902 = vld [vmem:[%s7 + $0x1c8] sm:$0xff]
    %v1903 = vld [vmem:[%s7 + $0x1d0] sm:$0xff]
    %v1904 = vld [vmem:[%s7 + $0x1d8] sm:$0xff]
    %v1905 = vld [vmem:[%s7 + $0x1e0] sm:$0xff]
    %v1906 = vld [vmem:[%s7 + $0x1e8] sm:$0xff]
    %v1907 = vld [vmem:[%s7 + $0x1f0] sm:$0xff]
    %v1908 = vld [vmem:[%s7 + $0x1f8] sm:$0xff]
    %v1909 = vld [vmem:[%s8] sm:$0x1]
    %v1911 = vlaneseq
    %v1912 = vshrl.u32 %v1911, 7
    %v1913 = vsub.s32 0, %v1912
    %v1914 = vrot.slane %v1909, %v1913
    %1916 = vmatprep.subr.mxu0 0.0
    %1917 = vmatpush1.msra.mxu0 %v1845
    %1918 = vmatprep.subr.mxu0 0.0
    %1919 = vmatpush1.msra.mxu0 %v1846
    %1920 = vmatprep.subr.mxu0 0.0
    %1921 = vmatpush1.msra.mxu0 %v1847
    %1922 = vmatprep.subr.mxu0 0.0
    %1923 = vmatpush1.msra.mxu0 %v1848
    %1924 = vmatprep.subr.mxu0 0.0
    %1925 = vmatpush1.msra.mxu0 %v1849
    %1926 = vmatprep.subr.mxu0 0.0
    %1927 = vmatpush1.msra.mxu0 %v1850
    %1928 = vmatprep.subr.mxu0 0.0
    %1929 = vmatpush1.msra.mxu0 %v1851
    %1930 = vmatprep.subr.mxu0 0.0
    %1931 = vmatpush1.msra.mxu0 %v1852
    %1932 = vmatprep.subr.mxu0 0.0
    %1933 = vmatpush1.msra.mxu0 %v1853
    %1934 = vmatprep.subr.mxu0 0.0
    %1935 = vmatpush1.msra.mxu0 %v1854
    %1936 = vmatprep.subr.mxu0 0.0
    %1937 = vmatpush1.msra.mxu0 %v1855
    %1938 = vmatprep.subr.mxu0 0.0
    %1939 = vmatpush1.msra.mxu0 %v1856
    %1940 = vmatprep.subr.mxu0 0.0
    %1941 = vmatpush1.msra.mxu0 %v1857
    %1942 = vmatprep.subr.mxu0 0.0
    %1943 = vmatpush1.msra.mxu0 %v1858
    %1944 = vmatprep.subr.mxu0 0.0
    %1945 = vmatpush1.msra.mxu0 %v1859
    %1946 = vmatprep.subr.mxu0 0.0
    %1947 = vmatpush1.msra.mxu0 %v1860
    %1948 = vmatprep.subr.mxu0 0.0
    %1949 = vmatpush1.msra.mxu0 %v1861
    %1950 = vmatprep.subr.mxu0 0.0
    %1951 = vmatpush1.msra.mxu0 %v1862
    %1952 = vmatprep.subr.mxu0 0.0
    %1953 = vmatpush1.msra.mxu0 %v1863
    %1954 = vmatprep.subr.mxu0 0.0
    %1955 = vmatpush1.msra.mxu0 %v1864
    %1956 = vmatprep.subr.mxu0 0.0
    %1957 = vmatpush1.msra.mxu0 %v1865
    %1958 = vmatprep.subr.mxu0 0.0
    %1959 = vmatpush1.msra.mxu0 %v1866
    %1960 = vmatprep.subr.mxu0 0.0
    %1961 = vmatpush1.msra.mxu0 %v1867
    %1962 = vmatprep.subr.mxu0 0.0
    %1963 = vmatpush1.msra.mxu0 %v1868
    %1964 = vmatprep.subr.mxu0 0.0
    %1965 = vmatpush1.msra.mxu0 %v1869
    %1966 = vmatprep.subr.mxu0 0.0
    %1967 = vmatpush1.msra.mxu0 %v1870
    %1968 = vmatprep.subr.mxu0 0.0
    %1969 = vmatpush1.msra.mxu0 %v1871
    %1970 = vmatprep.subr.mxu0 0.0
    %1971 = vmatpush1.msra.mxu0 %v1872
    %1972 = vmatprep.subr.mxu0 0.0
    %1973 = vmatpush1.msra.mxu0 %v1873
    %1974 = vmatprep.subr.mxu0 0.0
    %1975 = vmatpush1.msra.mxu0 %v1874
    %1976 = vmatprep.subr.mxu0 0.0
    %1977 = vmatpush1.msra.mxu0 %v1875
    %1978 = vmatprep.subr.mxu0 0.0
    %1979 = vmatpush1.msra.mxu0 %v1876
    %1980 = vmatprep.mubr.f32.mxu0 %v1838
    %1981 = vmatmul.mubr.f32.gmra.mrb[0].mxu0 %v1837
    %v1982 = vpop.f32.mrb[0].mxu0
    %v1983 = vadd.f32 %v1914, %v1982
    %v1984 = vpop.f32.mrb[0].mxu0
    %1985 = vmatprep.mubr.f32.mxu0 %v1842
    %1986 = vmatmul.mubr.f32.gmra.mrb[0].mxu0 %v1841
    %v1987 = vpop.f32.mrb[0].mxu0
    %v1988 = vadd.f32 %v1914, %v1987
    %v1989 = vpop.f32.mrb[0].mxu0
    %1990 = vdwg.mxu0
    %1991 = vmatprep.subr.mxu0 0.0
    %1992 = vmatpush1.msra.mxu0 %v1877
    %1993 = vmatprep.subr.mxu0 0.0
    %1994 = vmatpush1.msra.mxu0 %v1878
    %1995 = vmatprep.subr.mxu0 0.0
    %1996 = vmatpush1.msra.mxu0 %v1879
    %1997 = vmatprep.subr.mxu0 0.0
    %1998 = vmatpush1.msra.mxu0 %v1880
    %1999 = vmatprep.subr.mxu0 0.0
    %2000 = vmatpush1.msra.mxu0 %v1881
    %2001 = vmatprep.subr.mxu0 0.0
    %2002 = vmatpush1.msra.mxu0 %v1882
    %2003 = vmatprep.subr.mxu0 0.0
    %2004 = vmatpush1.msra.mxu0 %v1883
    %2005 = vmatprep.subr.mxu0 0.0
    %2006 = vmatpush1.msra.mxu0 %v1884
    %2007 = vmatprep.subr.mxu0 0.0
    %2008 = vmatpush1.msra.mxu0 %v1885
    %2009 = vmatprep.subr.mxu0 0.0
    %2010 = vmatpush1.msra.mxu0 %v1886
    %2011 = vmatprep.subr.mxu0 0.0
    %2012 = vmatpush1.msra.mxu0 %v1887
    %2013 = vmatprep.subr.mxu0 0.0
    %2014 = vmatpush1.msra.mxu0 %v1888
    %2015 = vmatprep.subr.mxu0 0.0
    %2016 = vmatpush1.msra.mxu0 %v1889
    %2017 = vmatprep.subr.mxu0 0.0
    %2018 = vmatpush1.msra.mxu0 %v1890
    %2019 = vmatprep.subr.mxu0 0.0
    %2020 = vmatpush1.msra.mxu0 %v1891
    %2021 = vmatprep.subr.mxu0 0.0
    %2022 = vmatpush1.msra.mxu0 %v1892
    %2023 = vmatprep.subr.mxu0 0.0
    %2024 = vmatpush1.msra.mxu0 %v1893
    %2025 = vmatprep.subr.mxu0 0.0
    %2026 = vmatpush1.msra.mxu0 %v1894
    %2027 = vmatprep.subr.mxu0 0.0
    %2028 = vmatpush1.msra.mxu0 %v1895
    %2029 = vmatprep.subr.mxu0 0.0
    %2030 = vmatpush1.msra.mxu0 %v1896
    %2031 = vmatprep.subr.mxu0 0.0
    %2032 = vmatpush1.msra.mxu0 %v1897
    %2033 = vmatprep.subr.mxu0 0.0
    %2034 = vmatpush1.msra.mxu0 %v1898
    %2035 = vmatprep.subr.mxu0 0.0
    %2036 = vmatpush1.msra.mxu0 %v1899
    %2037 = vmatprep.subr.mxu0 0.0
    %2038 = vmatpush1.msra.mxu0 %v1900
    %2039 = vmatprep.subr.mxu0 0.0
    %2040 = vmatpush1.msra.mxu0 %v1901
    %2041 = vmatprep.subr.mxu0 0.0
    %2042 = vmatpush1.msra.mxu0 %v1902
    %2043 = vmatprep.subr.mxu0 0.0
    %2044 = vmatpush1.msra.mxu0 %v1903
    %2045 = vmatprep.subr.mxu0 0.0
    %2046 = vmatpush1.msra.mxu0 %v1904
    %2047 = vmatprep.subr.mxu0 0.0
    %2048 = vmatpush1.msra.mxu0 %v1905
    %2049 = vmatprep.subr.mxu0 0.0
    %2050 = vmatpush1.msra.mxu0 %v1906
    %2051 = vmatprep.subr.mxu0 0.0
    %2052 = vmatpush1.msra.mxu0 %v1907
    %2053 = vmatprep.subr.mxu0 0.0
    %2054 = vmatpush1.msra.mxu0 %v1908
    %2055 = vmatprep.mubr.f32.mxu0 %v1840
    %2056 = vmatmul.mubr.f32.gmra.mrb[0].mxu0 %v1839
    %v2057 = vpop.f32.mrb[0].mxu0
    %v2058 = vadd.f32 %v1983, %v2057
    %v2059 = vpop.f32.mrb[0].mxu0
    %2060 = vmatprep.mubr.f32.mxu0 %v1844
    %2061 = vmatmul.mubr.f32.gmra.mrb[0].mxu0 %v1843
    %v2062 = vpop.f32.mrb[0].mxu0
    %v2063 = vadd.f32 %v1988, %v2062
    %v2064 = vpop.f32.mrb[0].mxu0
    %2065 = vdwg.mxu0
    %v2066 = vadd.f32 %v1637, %v2058
    %v2067 = vadd.f32 %v1638, %v2063
    %v2068 = vsel %vm58, %v2066, 0.0
    %2069 = vadd.xlane.f32.xlu0 %v2068
    %v2070 = vpop.xlane.xlu0 %2069
    %v2071 = vsel %vm58, %v2067, 0.0
    %2072 = vadd.xlane.f32.xlu0 %v2071
    %v2073 = vpop.xlane.xlu0 %2072
    %v2074 = vmul.f32 %v2070, %v1600
    %v2075 = vmul.f32 %v2073, %v1600
    %v2076 = vsub.f32 %v2066, %v2074
    %v2077 = vsub.f32 %v2067, %v2075
    %v2078 = vmul.f32 %v2076, %v2076
    %v2079 = vmul.f32 %v2077, %v2077
    %v2080 = vsel %vm58, %v2078, 0.0
    %2081 = vadd.xlane.f32.xlu0 %v2080
    %v2082 = vpop.xlane.xlu0 %2081
    %v2083 = vsel %vm58, %v2079, 0.0
    %2084 = vadd.xlane.f32.xlu0 %v2083
    %v2085 = vpop.xlane.xlu0 %2084
    %v2086 = vmul.f32 %v2082, %v1600
    %v2087 = vmul.f32 %v2085, %v1600
    %v2088 = vadd.f32 %v2086, 1e-05
    %v2089 = vadd.f32 %v2087, 1e-05
    %v2090 = vrsqrt.pop %v2088
    %v2091 = vrsqrt.pop %v2089
    %v2092 = vmul.f32 %v2076, %v2090
    %v2093 = vmul.f32 %v2077, %v2091
    %v2094 = vld [vmem:[%s11] sm:$0x1]
    %v2096 = vlaneseq
    %v2097 = vshrl.u32 %v2096, 7
    %v2098 = vsub.s32 0, %v2097
    %v2099 = vrot.slane %v2094, %v2098
    %v2101 = vmul.f32 %v2092, %v2099
    %v2102 = vmul.f32 %v2093, %v2099
    %v2103 = vld [vmem:[%s12] sm:$0x1]
    %v2105 = vlaneseq
    %v2106 = vshrl.u32 %v2105, 7
    %v2107 = vsub.s32 0, %v2106
    %v2108 = vrot.slane %v2103, %v2107
    %v2110 = vadd.f32 %v2101, %v2108
    %v2111 = vadd.f32 %v2102, %v2108
    %2112 = vst.msk [vmem:[#allocation3] sm:$0xff] %vm58, %v2110
    %2113 = vst.msk [vmem:[#allocation3 + $0x8] sm:$0xff] %vm58, %v2111
    // Predicated region
    $region54: #{transformer_forward.1} parent=1 // pred_check
      _
    $region55: #{transformer_forward.1} parent=1 // pred_check_branch
      %2115 = sbr.rel (0) target = $region57
    $region56: #{transformer_forward.1} parent=1 // pred_region
      %s2117 = ssub.s32 256, 256
      %2118 = vsyncadd [#allocation4], %s2117
      %s2119 = sshll.u32 [#allocation3], 4
      %s2120 = int_to_ptr.vmem [resolvable:$true] %s2119
      %2125 = dma.vmem_to_hbm [thread:$0]  %s2120, 256, %s13, [#allocation4], 128, 128, 8
    $region57: #{transformer_forward.1} parent=1 // pred_fallthru
      _
    // Predicated region
    $region58: #{transformer_forward.1} parent=1 // pred_check
      _
    $region59: #{transformer_forward.1} parent=1 // pred_check_branch
      %2127 = sbr.rel (0) target = $region61
    $region60: #{transformer_forward.1} parent=1 // pred_region
      %2128 = dma.done [#allocation4], 256
    $region61: #{transformer_forward.1} parent=1 // pred_fallthru
      _
    %2129 = vsyncpa [#allocation4], 1

</llo_original>
